<compile_context>
chip_gen: v7x
topology: tpu7x:2x2x1
jax: 0.10.0
libtpu: 0.0.40
codegen_flags: <defaults>
</compile_context>

<pallas_src>
import numpy as np
import jax
import jax.numpy as jnp
from jax import lax
from jax.experimental import pallas as pl
from jax.experimental.pallas import tpu as pltpu

WINDOW_SIZE = 11
SIGMA = 1.0            # matches create_window(): gaussian(window_size, 1)
C1 = 0.01 ** 2
C2 = 0.03 ** 2


def _gaussian_1d(window_size: int, sigma: float) -> np.ndarray:
    # torch: gauss = exp(-0.5*(x - ws//2)^2 / sigma^2); gauss / gauss.sum()
    x = np.arange(window_size, dtype=np.float32)
    g = np.exp(-0.5 * (x - window_size // 2) ** 2 / sigma ** 2).astype(np.float32)
    return (g / g.sum()).astype(np.float32)


def _reflect_conv_matrix(n: int, window_size: int, sigma: float) -> np.ndarray:
    """(n, n) matrix A with  A @ x == valid_conv(reflect_pad(x), gauss_1d)  along axis 0."""
    w = _gaussian_1d(window_size, sigma).astype(np.float64)
    pad = window_size // 2
    if n <= pad:
        raise ValueError(f"spatial dim {n} must be > window_size//2 ({pad}) for reflect pad")
    A = np.zeros((n, n), dtype=np.float64)
    for j in range(n):
        for k in range(window_size):
            o = j + k - pad          # source index into the reflect-padded signal
            if o < 0:
                s = -o               # mirror (no edge repeat), as in PyTorch 'reflect'
            elif o >= n:
                s = 2 * (n - 1) - o
            else:
                s = o
            A[j, s] += w[k]
    return A.astype(np.float32)


def _pick_plane_batch(nc: int, w: int) -> int:
    """# planes packed per grid step: lane-dense (B*W ~ 128) but keep >=2 grid steps."""
    target = max(1, -(-128 // max(w, 1)))          # ceil(128 / W)
    if nc >= 2:
        target = min(target, max(1, nc // 2))      # keep >=2 steps for v7x's 2 TCs
    target = max(1, min(target, nc))
    for b in range(target, 0, -1):
        if nc % b == 0:
            return b
    return 1


def _make_ssim_kernel(H: int, W: int, B: int):
    """Kernel closed over static tile geometry."""

    def kernel(x1_ref, x2_ref, av_ref, ah_ref, out_ref):
        x1 = x1_ref[0]              # (H, B*W)  B planes lane-packed side by side
        x2 = x2_ref[0]              # (H, B*W)
        av5 = av_ref[...]           # (5H, 5H)  block-diag vertical Gaussian (+reflect)
        ahb = ah_ref[...]           # (BW, BW)  block-diag horizontal Gaussian (+reflect)

        # Five signals stacked along sublanes -> each conv pass is ONE MXU matmul.
        sig = jnp.concatenate([x1, x2, x1 * x1, x2 * x2, x1 * x2], axis=0)   # (5H, BW)
        t = jnp.dot(av5, sig, precision=lax.Precision.HIGHEST,
                    preferred_element_type=jnp.float32)                      # vertical pass
        u = jnp.dot(t, ahb, precision=lax.Precision.HIGHEST,
                    preferred_element_type=jnp.float32)                      # horizontal pass

        mu1 = u[0:H]
        mu2 = u[H:2 * H]
        e11 = u[2 * H:3 * H]
        e22 = u[3 * H:4 * H]
        e12 = u[4 * H:5 * H]

        mu1_sq = mu1 * mu1
        mu2_sq = mu2 * mu2
        mu1_mu2 = mu1 * mu2
        sigma1_sq = jnp.maximum(e11 - mu1_sq, 0.0)   # .clamp(min=0), as in the spec
        sigma2_sq = jnp.maximum(e22 - mu2_sq, 0.0)
        sigma12 = e12 - mu1_mu2

        num = (2.0 * mu1_mu2 + C1) * (2.0 * sigma12 + C2)
        den = (mu1_sq + mu2_sq + C1) * (sigma1_sq + sigma2_sq + C2)
        ssim_map = num / den        # exact divide (keeps the 1e-3 tolerance comfortably)

        # size_average=True: reduce in-kernel, write one partial sum per grid step
        # (avoids writing the full NC*H*W SSIM map back to HBM).
        out_ref[0] = jnp.sum(ssim_map, keepdims=True)

    return kernel


def ssim_pallas(img1, img2, window_size=WINDOW_SIZE, size_average=True):
    """SSIM forward (out_parts=False).  img1, img2: NCHW float arrays in [0, 1]."""
    if not size_average:
        # TODO(synk): size_average=False / out_parts=True variants (non-default) are
        # not implemented in the Pallas path; the module default returns the scalar mean.
        raise NotImplementedError("only size_average=True is implemented")

    N, C, H, W = img1.shape
    NC = N * C
    pad = window_size // 2
    assert H > pad and W > pad, "reflect padding needs spatial dims > window_size // 2"

    B = _pick_plane_batch(NC, W)
    G = NC // B
    BW = B * W

    # Lane-pack B planes side by side: (N,C,H,W) -> (G, H, B*W).
    def pack(x):
        x = x.astype(jnp.float32).reshape(G, B, H, W)
        return x.transpose(0, 2, 1, 3).reshape(G, H, BW)

    x1 = pack(img1)
    x2 = pack(img2)

    # Banded conv matrices with reflect padding baked in.
    av = _reflect_conv_matrix(H, window_size, SIGMA)        # (H, H), left-multiply
    ah = _reflect_conv_matrix(W, window_size, SIGMA).T      # (W, W), right-multiply
    av5 = jnp.asarray(np.kron(np.eye(5, dtype=np.float32), av))   # (5H, 5H)
    ahb = jnp.asarray(np.kron(np.eye(B, dtype=np.float32), ah))   # (BW, BW)

    kernel = _make_ssim_kernel(H, W, B)
    # NOTE: for very large planes this whole-plane blocking should switch to row tiles
    # with a halo (v7x has only 64 MiB VMEM); fine at these shapes.
    partial = pl.pallas_call(
        kernel,
        out_shape=jax.ShapeDtypeStruct((G, 1, 1), jnp.float32),
        grid_spec=pltpu.PrefetchScalarGridSpec(
            num_scalar_prefetch=0,
            grid=(G,),
            in_specs=[
                pl.BlockSpec((1, H, BW), lambda i: (i, 0, 0)),
                pl.BlockSpec((1, H, BW), lambda i: (i, 0, 0)),
                pl.BlockSpec((5 * H, 5 * H), lambda i: (0, 0)),
                pl.BlockSpec((BW, BW), lambda i: (0, 0)),
            ],
            out_specs=pl.BlockSpec((1, 1, 1), lambda i: (i, 0, 0)),
        ),
        compiler_params=pltpu.CompilerParams(
            dimension_semantics=("parallel",),
            vmem_limit_bytes=64 * 1024 * 1024,
        ),
    )(x1, x2, av5, ahb)

    return jnp.sum(partial) / float(NC * H * W)


# ---------------------------------------------------------------------------
# Pure-JAX reference mirroring the PyTorch _ssim (size_average=True).
# ---------------------------------------------------------------------------
def _make_2d_window(window_size: int, channel: int) -> np.ndarray:
    w1 = _gaussian_1d(window_size, SIGMA)[:, None]            # (ws, 1)
    w2 = (w1 @ w1.T).astype(np.float32)                       # (ws, ws)
    return np.broadcast_to(w2, (channel, 1, window_size, window_size)).copy()


def _ssim_reference(img1, img2, window_size=WINDOW_SIZE):
    N, C, H, W = img1.shape
    pad = window_size // 2
    win = jnp.asarray(_make_2d_window(window_size, C))        # (C,1,ws,ws)

    def rpad(x):
        return jnp.pad(x, ((0, 0), (0, 0), (pad, pad), (pad, pad)), mode="reflect")

    def dwconv(x):
        return lax.conv_general_dilated(
            x, win, window_strides=(1, 1), padding="VALID",
            dimension_numbers=("NCHW", "OIHW", "NCHW"),
            feature_group_count=C, precision=lax.Precision.HIGHEST)

    i1, i2 = rpad(img1.astype(jnp.float32)), rpad(img2.astype(jnp.float32))
    mu1, mu2 = dwconv(i1), dwconv(i2)
    mu1_sq, mu2_sq, mu1_mu2 = mu1 * mu1, mu2 * mu2, mu1 * mu2
    s1 = jnp.maximum(dwconv(i1 * i1) - mu1_sq, 0.0)
    s2 = jnp.maximum(dwconv(i2 * i2) - mu2_sq, 0.0)
    s12 = dwconv(i1 * i2) - mu1_mu2
    ssim_map = ((2 * mu1_mu2 + C1) * (2 * s12 + C2)
                / ((mu1_sq + mu2_sq + C1) * (s1 + s2 + C2)))
    return jnp.mean(ssim_map)


if __name__ == "__main__":
    key = jax.random.PRNGKey(0)
    k1, k2 = jax.random.split(key)
    N, C, H, W = 2, 4, 16, 16
    img1 = jax.random.uniform(k1, (N, C, H, W), dtype=jnp.float32)
    img2 = jax.random.uniform(k2, (N, C, H, W), dtype=jnp.float32)

    out = jax.block_until_ready(ssim_pallas(img1, img2))
    ref = jax.block_until_ready(_ssim_reference(img1, img2))

    assert np.allclose(np.asarray(out), np.asarray(ref), rtol=1e-3, atol=1e-3), (
        f"mismatch: pallas={float(out)} ref={float(ref)}")
    print("KERNEL_OK")
</pallas_src>

<mosaic_0001>
module attributes {stable_mosaic.version = 11 : i64} {
  func.func @kernel(%arg0: i32, %arg1: memref<1x16x64xf32, #tpu.memory_space<vmem>>, %arg2: memref<1x16x64xf32, #tpu.memory_space<vmem>>, %arg3: memref<80x80xf32, #tpu.memory_space<vmem>>, %arg4: memref<64x64xf32, #tpu.memory_space<vmem>>, %arg5: memref<1x1x1xf32, #tpu.memory_space<vmem>>) attributes {dimension_semantics = [#tpu.dimension_semantics<parallel>], iteration_bounds = array<i64: 2>, scalar_prefetch = 0 : i64, scratch_operands = 0 : i64, tpu.core_type = #tpu.core_type<tc>, window_params = [{transform_indices = @transform_0, window_bounds = array<i64: 1, 16, 64>}, {transform_indices = @transform_1, window_bounds = array<i64: 1, 16, 64>}, {pipeline_mode = #tpu.pipeline_mode<synchronous>, transform_indices = @transform_2, window_bounds = array<i64: 80, 80>}, {pipeline_mode = #tpu.pipeline_mode<synchronous>, transform_indices = @transform_3, window_bounds = array<i64: 64, 64>}, {transform_indices = @transform_4, window_bounds = array<i64: 1, 1, 1>}]} {
    %c0 = arith.constant 0 : index
    %c0_0 = arith.constant 0 : index
    %c0_1 = arith.constant 0 : index
    %0 = vector.load %arg1[%c0, %c0_0, %c0_1] : memref<1x16x64xf32, #tpu.memory_space<vmem>>, vector<1x16x64xf32>
    %1 = vector.shape_cast %0 : vector<1x16x64xf32> to vector<16x64xf32>
    %c0_2 = arith.constant 0 : index
    %c0_3 = arith.constant 0 : index
    %c0_4 = arith.constant 0 : index
    %2 = vector.load %arg2[%c0_2, %c0_3, %c0_4] : memref<1x16x64xf32, #tpu.memory_space<vmem>>, vector<1x16x64xf32>
    %3 = vector.shape_cast %2 : vector<1x16x64xf32> to vector<16x64xf32>
    %c0_5 = arith.constant 0 : index
    %c0_6 = arith.constant 0 : index
    %4 = vector.load %arg3[%c0_5, %c0_6] : memref<80x80xf32, #tpu.memory_space<vmem>>, vector<80x80xf32>
    %c0_7 = arith.constant 0 : index
    %c0_8 = arith.constant 0 : index
    %5 = vector.load %arg4[%c0_7, %c0_8] : memref<64x64xf32, #tpu.memory_space<vmem>>, vector<64x64xf32>
    %6 = arith.mulf %1, %1 : vector<16x64xf32>
    %7 = arith.mulf %3, %3 : vector<16x64xf32>
    %8 = arith.mulf %1, %3 : vector<16x64xf32>
    %9 = tpu.concatenate %1, %3, %6, %7, %8 in 0 : vector<16x64xf32>, vector<16x64xf32>, vector<16x64xf32>, vector<16x64xf32>, vector<16x64xf32> -> vector<80x64xf32>
    %cst = arith.constant dense<0.000000e+00> : vector<80x64xf32>
    %10 = tpu.matmul %4, %9, %cst {dimension_numbers = #tpu.dot_dimension_numbers<[1], [0], [0], [1], [0, 0, 1, 1], [], []>, precision = #tpu.contract_precision<fp32>} : vector<80x80xf32>, vector<80x64xf32>, vector<80x64xf32> -> vector<80x64xf32>
    %cst_9 = arith.constant dense<0.000000e+00> : vector<80x64xf32>
    %11 = tpu.matmul %10, %5, %cst_9 {dimension_numbers = #tpu.dot_dimension_numbers<[1], [0], [0], [1], [0, 0, 1, 1], [], []>, precision = #tpu.contract_precision<fp32>} : vector<80x64xf32>, vector<64x64xf32>, vector<80x64xf32> -> vector<80x64xf32>
    %12 = vector.extract_strided_slice %11 {offsets = [0, 0], sizes = [16, 64], strides = [1, 1]} : vector<80x64xf32> to vector<16x64xf32>
    %13 = vector.extract_strided_slice %11 {offsets = [16, 0], sizes = [16, 64], strides = [1, 1]} : vector<80x64xf32> to vector<16x64xf32>
    %14 = vector.extract_strided_slice %11 {offsets = [32, 0], sizes = [16, 64], strides = [1, 1]} : vector<80x64xf32> to vector<16x64xf32>
    %15 = vector.extract_strided_slice %11 {offsets = [48, 0], sizes = [16, 64], strides = [1, 1]} : vector<80x64xf32> to vector<16x64xf32>
    %16 = vector.extract_strided_slice %11 {offsets = [64, 0], sizes = [16, 64], strides = [1, 1]} : vector<80x64xf32> to vector<16x64xf32>
    %17 = arith.mulf %12, %12 : vector<16x64xf32>
    %18 = arith.mulf %13, %13 : vector<16x64xf32>
    %19 = arith.mulf %12, %13 : vector<16x64xf32>
    %20 = arith.subf %14, %17 : vector<16x64xf32>
    %cst_10 = arith.constant 0.000000e+00 : f32
    %21 = vector.broadcast %cst_10 : f32 to vector<16x64xf32>
    %22 = arith.maximumf %20, %21 : vector<16x64xf32>
    %23 = arith.subf %15, %18 : vector<16x64xf32>
    %cst_11 = arith.constant 0.000000e+00 : f32
    %24 = vector.broadcast %cst_11 : f32 to vector<16x64xf32>
    %25 = arith.maximumf %23, %24 : vector<16x64xf32>
    %26 = arith.subf %16, %19 : vector<16x64xf32>
    %cst_12 = arith.constant 2.000000e+00 : f32
    %27 = vector.broadcast %cst_12 : f32 to vector<16x64xf32>
    %28 = arith.mulf %27, %19 : vector<16x64xf32>
    %cst_13 = arith.constant 9.99999974E-5 : f32
    %29 = vector.broadcast %cst_13 : f32 to vector<16x64xf32>
    %30 = arith.addf %28, %29 : vector<16x64xf32>
    %cst_14 = arith.constant 2.000000e+00 : f32
    %31 = vector.broadcast %cst_14 : f32 to vector<16x64xf32>
    %32 = arith.mulf %31, %26 : vector<16x64xf32>
    %cst_15 = arith.constant 8.99999984E-4 : f32
    %33 = vector.broadcast %cst_15 : f32 to vector<16x64xf32>
    %34 = arith.addf %32, %33 : vector<16x64xf32>
    %35 = arith.mulf %30, %34 : vector<16x64xf32>
    %36 = arith.addf %17, %18 : vector<16x64xf32>
    %cst_16 = arith.constant 9.99999974E-5 : f32
    %37 = vector.broadcast %cst_16 : f32 to vector<16x64xf32>
    %38 = arith.addf %36, %37 : vector<16x64xf32>
    %39 = arith.addf %22, %25 : vector<16x64xf32>
    %cst_17 = arith.constant 8.99999984E-4 : f32
    %40 = vector.broadcast %cst_17 : f32 to vector<16x64xf32>
    %41 = arith.addf %39, %40 : vector<16x64xf32>
    %42 = arith.mulf %38, %41 : vector<16x64xf32>
    %43 = arith.divf %35, %42 : vector<16x64xf32>
    %44 = vector.shape_cast %43 : vector<16x64xf32> to vector<1x16x64xf32>
    %cst_18 = arith.constant dense<0.000000e+00> : vector<1xf32>
    %45 = vector.multi_reduction <add>, %44, %cst_18 [1, 2] : vector<1x16x64xf32> to vector<1xf32>
    %46 = vector.shape_cast %45 : vector<1xf32> to vector<1x1x1xf32>
    %47 = vector.extract %46[0, 0, 0] : f32 from vector<1x1x1xf32>
    %48 = vector.broadcast %47 : f32 to vector<1x1xf32>
    %c0_19 = arith.constant 0 : index
    %c0_20 = arith.constant 0 : index
    %c0_21 = arith.constant 0 : index
    %49 = vector.load %arg5[%c0_19, %c0_20, %c0_21] : memref<1x1x1xf32, #tpu.memory_space<vmem>>, vector<1x1x1xf32>
    %50 = vector.shape_cast %49 : vector<1x1x1xf32> to vector<1x1xf32>
    %51 = vector.shape_cast %48 : vector<1x1xf32> to vector<1x1x1xf32>
    tpu.vector_store %arg5[%c0_19, %c0_20, %c0_21], %51 {strides = array<i32>} : memref<1x1x1xf32, #tpu.memory_space<vmem>>, vector<1x1x1xf32>,
    return
  }
  func.func @transform_0(%arg0: i32) -> (i32, i32, i32) {
    %c0_i32 = arith.constant 0 : i32
    %c0_i32_0 = arith.constant 0 : i32
    %c0_i32_1 = arith.constant 0 : i32
    return %arg0, %c0_i32, %c0_i32_0 : i32, i32, i32
  }
  func.func @transform_1(%arg0: i32) -> (i32, i32, i32) {
    %c0_i32 = arith.constant 0 : i32
    %c0_i32_0 = arith.constant 0 : i32
    %c0_i32_1 = arith.constant 0 : i32
    return %arg0, %c0_i32, %c0_i32_0 : i32, i32, i32
  }
  func.func @transform_2(%arg0: i32) -> (i32, i32) {
    %c0_i32 = arith.constant 0 : i32
    %c0_i32_0 = arith.constant 0 : i32
    %c0_i32_1 = arith.constant 0 : i32
    return %c0_i32, %c0_i32_0 : i32, i32
  }
  func.func @transform_3(%arg0: i32) -> (i32, i32) {
    %c0_i32 = arith.constant 0 : i32
    %c0_i32_0 = arith.constant 0 : i32
    %c0_i32_1 = arith.constant 0 : i32
    return %c0_i32, %c0_i32_0 : i32, i32
  }
  func.func @transform_4(%arg0: i32) -> (i32, i32, i32) {
    %c0_i32 = arith.constant 0 : i32
    %c0_i32_0 = arith.constant 0 : i32
    %c0_i32_1 = arith.constant 0 : i32
    return %arg0, %c0_i32, %c0_i32_0 : i32, i32, i32
  }
}

</mosaic_0001>

<llo_original>
// kernel: tpu_custom_call.1
$region0: #{tpu_custom_call.1}
  #allocation0 [shape = 'u32[]', space=smem, size = 0x4, offset = 0x4, fixed_abs, tag = 'smem constant byte address 0x4 - core index']
  #allocation1 [shape = 'u32[144,128]{1,0:T(1,128)}', space=vmem, size = 0x12000, scoped, tag = 'internal scratch']
  %s0 = inlined_call_operand.hbm [shape: f32[2,16,64], index: 0, kind: input, shape index: {}]
  %s1 = inlined_call_operand.hbm [shape: f32[2,16,64], index: 1, kind: input, shape index: {}]
  %s2 = inlined_call_operand.hbm [shape: f32[80,80], index: 2, kind: input, shape index: {}]
  %s3 = inlined_call_operand.hbm [shape: f32[64,64], index: 3, kind: input, shape index: {}]
  %s4 = inlined_call_operand.hbm [shape: f32[2,1,1], index: 4, kind: output, shape index: {}]
  %s5 = sld [smem:[#allocation0]]
  $region65: #{tpu_custom_call.1} parent=0
    _
  %s7 = ssub.s32 1, %s5
  %s8 = scalar_select 0, %s7, %s5
  $region1: #{tpu_custom_call.1} parent=0
    #allocation2 [shape = 'u8[16384]{0}', space=vmem, size = 0x4000, scoped, tag = 'input window, operand 0']
    #allocation3 [shape = 's32[2]{0}', space=sflag, size = 0x8, scoped, tag = 'scoped memory for tpu_custom_call.1']
    #allocation4 [shape = 's32[2]{0}', space=sflag, size = 0x8, scoped, tag = 'scoped memory for tpu_custom_call.1']
    #allocation5 [shape = 'u8[16384]{0}', space=vmem, size = 0x4000, scoped, tag = 'input window, operand 1']
    #allocation6 [shape = 's32[2]{0}', space=sflag, size = 0x8, scoped, tag = 'scoped memory for tpu_custom_call.1']
    #allocation7 [shape = 'u8[40960]{0}', space=vmem, size = 0xa000, scoped, tag = 'input window, operand 2, single buffered']
    #allocation8 [shape = 'u8[32768]{0}', space=vmem, size = 0x8000, scoped, tag = 'input window, operand 3, single buffered']
    #allocation9 [shape = 's32[1]{0}', space=sflag, size = 0x4, scoped, tag = 'scoped memory for tpu_custom_call.1']
    #allocation10 [shape = 'u8[1024]{0}', space=vmem, size = 0x400, scoped, tag = 'output window, operand 0']
    %9 = vsyncpa [#allocation3], 0
    %s10 = scalar_lea.sflag [#allocation3], 1
    %11 = vsyncpa %s10, 0
    %12 = vsyncpa [#allocation6], 0
    %s13 = scalar_lea.sflag [#allocation6], 1
    %14 = vsyncpa %s13, 0
    %15 = vsyncpa [#allocation9], 0
    %16 = vsyncpa [#allocation4], 0
    %s17 = scalar_lea.sflag [#allocation4], 1
    %18 = vsyncpa %s17, 0
    loop: start=0, step=1, limit=4
    $region2: #{tpu_custom_call.1} parent=1 // loop_pre_header
      _
    $region3: #{tpu_custom_call.1} parent=1 // loop_header
      %s20 = sphi 0, %s24
      %p21 = scmp.ge.s32.totalorder %s20, 4
      %s30 = sphi 0, %s32
      %s33 = sphi 0, %s30
      %s34 = sphi 0, %s33
      %s50 = sphi 0, %s34
      %s56 = sphi 0, %s58
      %s59 = sphi 0, %s56
      %s60 = sphi 0, %s59
      %s76 = sphi 0, %s60
      %s80 = sphi 0, %s80
      %s82 = sphi 0, %s80
      %s83 = sphi 0, %s82
      %s97 = sphi 0, %s83
      %s101 = sphi 0, %s101
      %s103 = sphi 0, %s101
      %s104 = sphi 0, %s103
      %s118 = sphi 0, %s104
      %s124 = sphi 0, %s126
      %s127 = sphi 0, %s124
      %s128 = sphi 0, %s127
      %s144 = sphi 0, %s128
    $region4: #{tpu_custom_call.1} parent=1 // loop_header_branch
      %23 = sbr.rel (%p21) target = $region8
    $region5: #{tpu_custom_call.1} parent=1 // loop_body
      %s25 = ssub.s32 %s20, 1
      %s26 = ssub.s32 %s20, 2
      %s27 = sadd.s32 %s20, 1
      %s28 = ssub.s32 %s20, %s27
      %p29 = scmp.eq.s32.totalorder %s28, 0
      %s31 = sadd.s32 %s30, 1
      %s32 = scalar_select %p29, %s30, %s31
      %p35 = pneg %p29
      %p36 = scmp.eq.s32.totalorder %s20, 1
      %p37 = por %p35, %p36
      %p38 = scmp.ne.s32.totalorder %s30, %s33
      %p39 = scmp.eq.s32.totalorder %s20, 0
      %p40 = por %p38, %p39
      %p41 = scmp.ne.s32.totalorder %s30, %s33
      %p42 = scmp.eq.s32.totalorder %s25, 1
      %p43 = por %p41, %p42
      %p44 = scmp.ne.s32.totalorder %s33, %s34
      %p45 = scmp.eq.s32.totalorder %s25, 0
      %p46 = por %p44, %p45
      %p47 = scmp.ne.s32.totalorder %s33, %s34
      %p48 = scmp.eq.s32.totalorder %s26, 1
      %p49 = por %p47, %p48
      %p51 = scmp.ne.s32.totalorder %s34, %s50
      %p52 = scmp.eq.s32.totalorder %s26, 0
      %p53 = por %p51, %p52
      %s54 = ssub.s32 %s20, %s27
      %p55 = scmp.eq.s32.totalorder %s54, 0
      %s57 = sadd.s32 %s56, 1
      %s58 = scalar_select %p55, %s56, %s57
      %p61 = pneg %p55
      %p62 = scmp.eq.s32.totalorder %s20, 1
      %p63 = por %p61, %p62
      %p64 = scmp.ne.s32.totalorder %s56, %s59
      %p65 = scmp.eq.s32.totalorder %s20, 0
      %p66 = por %p64, %p65
      %p67 = scmp.ne.s32.totalorder %s56, %s59
      %p68 = scmp.eq.s32.totalorder %s25, 1
      %p69 = por %p67, %p68
      %p70 = scmp.ne.s32.totalorder %s59, %s60
      %p71 = scmp.eq.s32.totalorder %s25, 0
      %p72 = por %p70, %p71
      %p73 = scmp.ne.s32.totalorder %s59, %s60
      %p74 = scmp.eq.s32.totalorder %s26, 1
      %p75 = por %p73, %p74
      %p77 = scmp.ne.s32.totalorder %s60, %s76
      %p78 = scmp.eq.s32.totalorder %s26, 0
      %p79 = por %p77, %p78
      %s81 = sadd.s32 %s80, 1
      %p84 = scmp.eq.s32.totalorder %s20, 1
      %p85 = scmp.ne.s32.totalorder %s80, %s82
      %p86 = scmp.eq.s32.totalorder %s20, 0
      %p87 = por %p85, %p86
      %p88 = scmp.ne.s32.totalorder %s80, %s82
      %p89 = scmp.eq.s32.totalorder %s25, 1
      %p90 = por %p88, %p89
      %p91 = scmp.ne.s32.totalorder %s82, %s83
      %p92 = scmp.eq.s32.totalorder %s25, 0
      %p93 = por %p91, %p92
      %p94 = scmp.ne.s32.totalorder %s82, %s83
      %p95 = scmp.eq.s32.totalorder %s26, 1
      %p96 = por %p94, %p95
      %p98 = scmp.ne.s32.totalorder %s83, %s97
      %p99 = scmp.eq.s32.totalorder %s26, 0
      %p100 = por %p98, %p99
      %s102 = sadd.s32 %s101, 1
      %p105 = scmp.eq.s32.totalorder %s20, 1
      %p106 = scmp.ne.s32.totalorder %s101, %s103
      %p107 = scmp.eq.s32.totalorder %s20, 0
      %p108 = por %p106, %p107
      %p109 = scmp.ne.s32.totalorder %s101, %s103
      %p110 = scmp.eq.s32.totalorder %s25, 1
      %p111 = por %p109, %p110
      %p112 = scmp.ne.s32.totalorder %s103, %s104
      %p113 = scmp.eq.s32.totalorder %s25, 0
      %p114 = por %p112, %p113
      %p115 = scmp.ne.s32.totalorder %s103, %s104
      %p116 = scmp.eq.s32.totalorder %s26, 1
      %p117 = por %p115, %p116
      %p119 = scmp.ne.s32.totalorder %s104, %s118
      %p120 = scmp.eq.s32.totalorder %s26, 0
      %p121 = por %p119, %p120
      %s122 = ssub.s32 %s20, %s27
      %p123 = scmp.eq.s32.totalorder %s122, 0
      %s125 = sadd.s32 %s124, 1
      %s126 = scalar_select %p123, %s124, %s125
      %p129 = pneg %p123
      %p130 = scmp.eq.s32.totalorder %s20, 1
      %p131 = por %p129, %p130
      %p132 = scmp.ne.s32.totalorder %s124, %s127
      %p133 = scmp.eq.s32.totalorder %s20, 0
      %p134 = por %p132, %p133
      %p135 = scmp.ne.s32.totalorder %s124, %s127
      %p136 = scmp.eq.s32.totalorder %s25, 1
      %p137 = por %p135, %p136
      %p138 = scmp.ne.s32.totalorder %s127, %s128
      %p139 = scmp.eq.s32.totalorder %s25, 0
      %p140 = por %p138, %p139
      %p141 = scmp.ne.s32.totalorder %s127, %s128
      %p142 = scmp.eq.s32.totalorder %s26, 1
      %p143 = por %p141, %p142
      %p145 = scmp.ne.s32.totalorder %s128, %s144
      %p146 = scmp.eq.s32.totalorder %s26, 0
      %p147 = por %p145, %p146
      %p148 = scmp.le.s32.totalorder 1, %s20
      %p149 = scmp.lt.s32.totalorder %s20, 3
      %p150 = pnand %p148, %p149
      %p151 = pneg %p150
      // Predicated region
      $region9: #{tpu_custom_call.1} parent=5 // pred_check
        _
      $region10: #{tpu_custom_call.1} parent=5 // pred_check_branch
        %153 = sbr.rel (%p150) target = $region12
      $region11: #{tpu_custom_call.1} parent=5 // pred_region
        %s154 = ssub.s32 %s20, 1
        // Predicated region
        $region13: #{tpu_custom_call.1} parent=11 // pred_check
          %p155 = pneg %p93
        $region14: #{tpu_custom_call.1} parent=11 // pred_check_branch
          %157 = sbr.rel (%p155) target = $region16
        $region15: #{tpu_custom_call.1} parent=11 // pred_region
          %s159 = ssub.s32 1280, 1280
          %160 = vsyncadd [#allocation6], %s159
          %s161 = sshll.u32 [#allocation7], 4
          %s162 = int_to_ptr.vmem [resolvable:$true] %s161
          %167 = dma.hbm_to_vmem [thread:$0]  %s2, 1280, %s162, [#allocation6], 128, 128, 8
        $region16: #{tpu_custom_call.1} parent=11 // pred_fallthru
          _
        // Predicated region
        $region17: #{tpu_custom_call.1} parent=11 // pred_check
          %p168 = pneg %p114
        $region18: #{tpu_custom_call.1} parent=11 // pred_check_branch
          %170 = sbr.rel (%p168) target = $region20
        $region19: #{tpu_custom_call.1} parent=11 // pred_region
          %s172 = ssub.s32 1024, 1024
          %173 = vsyncadd [#allocation9], %s172
          %s174 = sshll.u32 [#allocation8], 4
          %s175 = int_to_ptr.vmem [resolvable:$true] %s174
          %180 = dma.hbm_to_vmem [thread:$0]  %s3, 1024, %s175, [#allocation9], 128, 128, 8
        $region20: #{tpu_custom_call.1} parent=11 // pred_fallthru
          _
      $region12: #{tpu_custom_call.1} parent=5 // pred_fallthru
        _
      %p181 = scmp.lt.s32.totalorder %s20, 2
      // Predicated region
      $region21: #{tpu_custom_call.1} parent=5 // pred_check
        %p182 = pneg %p181
      $region22: #{tpu_custom_call.1} parent=5 // pred_check_branch
        %184 = sbr.rel (%p182) target = $region24
      $region23: #{tpu_custom_call.1} parent=5 // pred_region
        // Predicated region
        $region25: #{tpu_custom_call.1} parent=23 // pred_check
          %p185 = pneg %p40
        $region26: #{tpu_custom_call.1} parent=23 // pred_check_branch
          %187 = sbr.rel (%p185) target = $region28
        $region27: #{tpu_custom_call.1} parent=23 // pred_region
          %s188 = sand.u32 %s30, 1
          %s189 = scalar_lea.sflag [#allocation3], %s188
          %s190 = sand.u32 %s30, 1
          %s191 = smul.addr %s190, 16
          %s192 = scalar_lea.vmem [#allocation2], %s191
          %s194 = ssub.s32 256, 256
          %195 = vsyncadd %s189, %s194
          %s196 = smul.addr %s20, 2
          %s197 = smul.addr %s196, 128
          %s198 = scalar_lea.hbm %s0, %s197
          %s199 = sshll.u32 %s192, 4
          %s200 = int_to_ptr.vmem [resolvable:$true] %s199
          %205 = dma.hbm_to_vmem [thread:$0]  %s198, 256, %s200, %s189, 128, 128, 8
        $region28: #{tpu_custom_call.1} parent=23 // pred_fallthru
          _
        // Predicated region
        $region29: #{tpu_custom_call.1} parent=23 // pred_check
          %p206 = pneg %p66
        $region30: #{tpu_custom_call.1} parent=23 // pred_check_branch
          %208 = sbr.rel (%p206) target = $region32
        $region31: #{tpu_custom_call.1} parent=23 // pred_region
          %s209 = sand.u32 %s20, 1
          %s210 = scalar_lea.sflag [#allocation6], %s209
          %s211 = sand.u32 %s56, 1
          %s212 = smul.addr %s211, 16
          %s213 = scalar_lea.vmem [#allocation5], %s212
          %s215 = ssub.s32 256, 256
          %216 = vsyncadd %s210, %s215
          %s217 = smul.addr %s20, 2
          %s218 = smul.addr %s217, 128
          %s219 = scalar_lea.hbm %s1, %s218
          %s220 = sshll.u32 %s213, 4
          %s221 = int_to_ptr.vmem [resolvable:$true] %s220
          %226 = dma.hbm_to_vmem [thread:$0]  %s219, 256, %s221, %s210, 128, 128, 8
        $region32: #{tpu_custom_call.1} parent=23 // pred_fallthru
          _
      $region24: #{tpu_custom_call.1} parent=5 // pred_fallthru
        _
      %p227 = scmp.le.s32.totalorder 1, %s20
      %p228 = scmp.lt.s32.totalorder %s20, 3
      %p229 = pnand %p227, %p228
      %p230 = pneg %p229
      // Predicated region
      $region33: #{tpu_custom_call.1} parent=5 // pred_check
        _
      $region34: #{tpu_custom_call.1} parent=5 // pred_check_branch
        %232 = sbr.rel (%p229) target = $region36
      $region35: #{tpu_custom_call.1} parent=5 // pred_region
        %s233 = ssub.s32 %s20, 1
        %s234 = sand.u32 %s33, 1
        %s235 = scalar_lea.sflag [#allocation3], %s234
        %s236 = sand.u32 %s33, 1
        %s237 = smul.addr %s236, 16
        %s238 = scalar_lea.vmem [#allocation2], %s237
        // Predicated region
        $region37: #{tpu_custom_call.1} parent=35 // pred_check
          %p239 = pneg %p46
        $region38: #{tpu_custom_call.1} parent=35 // pred_check_branch
          %241 = sbr.rel (%p239) target = $region40
        $region39: #{tpu_custom_call.1} parent=35 // pred_region
          %242 = dma.done %s235, 256
        $region40: #{tpu_custom_call.1} parent=35 // pred_fallthru
          _
        %s243 = sand.u32 %s25, 1
        %s244 = scalar_lea.sflag [#allocation6], %s243
        %s245 = sand.u32 %s59, 1
        %s246 = smul.addr %s245, 16
        %s247 = scalar_lea.vmem [#allocation5], %s246
        // Predicated region
        $region41: #{tpu_custom_call.1} parent=35 // pred_check
          %p248 = pneg %p72
        $region42: #{tpu_custom_call.1} parent=35 // pred_check_branch
          %250 = sbr.rel (%p248) target = $region44
        $region43: #{tpu_custom_call.1} parent=35 // pred_region
          %251 = dma.done %s244, 256
        $region44: #{tpu_custom_call.1} parent=35 // pred_fallthru
          _
        // Predicated region
        $region45: #{tpu_custom_call.1} parent=35 // pred_check
          %p252 = pneg %p93
        $region46: #{tpu_custom_call.1} parent=35 // pred_check_branch
          %254 = sbr.rel (%p252) target = $region48
        $region47: #{tpu_custom_call.1} parent=35 // pred_region
          %255 = dma.done [#allocation6], 1280
        $region48: #{tpu_custom_call.1} parent=35 // pred_fallthru
          _
        // Predicated region
        $region49: #{tpu_custom_call.1} parent=35 // pred_check
          %p256 = pneg %p114
        $region50: #{tpu_custom_call.1} parent=35 // pred_check_branch
          %258 = sbr.rel (%p256) target = $region52
        $region51: #{tpu_custom_call.1} parent=35 // pred_region
          %259 = dma.done [#allocation9], 1024
        $region52: #{tpu_custom_call.1} parent=35 // pred_fallthru
          _
        %s260 = sand.u32 %s33, 1
        %s261 = scalar_lea.sflag [#allocation3], %s260
        %s262 = sand.u32 %s33, 1
        %s263 = smul.addr %s262, 16
        %s264 = scalar_lea.vmem [#allocation2], %s263
        %p265 = pneg %p46
        %p266 = pneg %p43
        %s267 = sand.u32 %s25, 1
        %s268 = scalar_lea.sflag [#allocation6], %s267
        %s269 = sand.u32 %s59, 1
        %s270 = smul.addr %s269, 16
        %s271 = scalar_lea.vmem [#allocation5], %s270
        %p272 = pneg %p72
        %p273 = pneg %p69
        %p274 = pneg %p93
        %p275 = pneg %p90
        %p276 = pneg %p114
        %p277 = pneg %p111
        %p278 = pneg %p140
        %p279 = pneg %p137
        %s280 = sand.u32 %s127, 1
        %s281 = scalar_lea.sflag [#allocation4], %s280
        %s282 = sand.u32 %s127, 1
        %s283 = scalar_lea.vmem [#allocation10], %s282
        %v284 = vld [vmem:[%s238] sm:$0xff]
        %v285 = vld [vmem:[%s238 + $0x8] sm:$0xff]
        %v286 = vld [vmem:[%s247] sm:$0xff]
        %v287 = vld [vmem:[%s247 + $0x8] sm:$0xff]
        %v288 = vld [vmem:[#allocation7] sm:$0xff]
        %v289 = vld [vmem:[#allocation7 + $0x8] sm:$0xff]
        %v290 = vld [vmem:[#allocation7 + $0x10] sm:$0xff]
        %v291 = vld [vmem:[#allocation7 + $0x18] sm:$0xff]
        %v292 = vld [vmem:[#allocation7 + $0x20] sm:$0xff]
        %v293 = vld [vmem:[#allocation7 + $0x28] sm:$0xff]
        %v294 = vld [vmem:[#allocation7 + $0x30] sm:$0xff]
        %v295 = vld [vmem:[#allocation7 + $0x38] sm:$0xff]
        %v296 = vld [vmem:[#allocation7 + $0x40] sm:$0xff]
        %v297 = vld [vmem:[#allocation7 + $0x48] sm:$0xff]
        %v298 = vld [vmem:[#allocation8] sm:$0xff]
        %v299 = vld [vmem:[#allocation8 + $0x8] sm:$0xff]
        %v300 = vld [vmem:[#allocation8 + $0x10] sm:$0xff]
        %v301 = vld [vmem:[#allocation8 + $0x18] sm:$0xff]
        %v302 = vld [vmem:[#allocation8 + $0x20] sm:$0xff]
        %v303 = vld [vmem:[#allocation8 + $0x28] sm:$0xff]
        %v304 = vld [vmem:[#allocation8 + $0x30] sm:$0xff]
        %v305 = vld [vmem:[#allocation8 + $0x38] sm:$0xff]
        %v306 = vmul.f32 %v284, %v284
        %v307 = vmul.f32 %v285, %v285
        %v308 = vmul.f32 %v286, %v286
        %v309 = vmul.f32 %v287, %v287
        %v310 = vmul.f32 %v284, %v286
        %v311 = vmul.f32 %v285, %v287
        %vm312 = vcmask 654336
        %v314 = vsel %vm312, %v288, 0
        %v317 = vsel %vm312, %v289, 0
        %v320 = vsel %vm312, %v290, 0
        %v323 = vsel %vm312, %v291, 0
        %v326 = vsel %vm312, %v292, 0
        %v329 = vsel %vm312, %v293, 0
        %v332 = vsel %vm312, %v294, 0
        %v335 = vsel %vm312, %v295, 0
        %v338 = vsel %vm312, %v296, 0
        %v341 = vsel %vm312, %v297, 0
        %343 = vmatprep.subr.mxu0 0.0
        %v344 = vand.u32 %v284, 4294901760
        %345 = vmatpush1.msra.mxu0 %v344
        %346 = vmatprep.subr.mxu0 0.0
        %v347 = vand.u32 %v285, 4294901760
        %348 = vmatpush1.msra.mxu0 %v347
        %349 = vmatprep.subr.mxu0 0.0
        %v350 = vand.u32 %v286, 4294901760
        %351 = vmatpush1.msra.mxu0 %v350
        %352 = vmatprep.subr.mxu0 0.0
        %v353 = vand.u32 %v287, 4294901760
        %354 = vmatpush1.msra.mxu0 %v353
        %355 = vmatprep.subr.mxu0 0.0
        %v356 = vand.u32 %v306, 4294901760
        %357 = vmatpush1.msra.mxu0 %v356
        %358 = vmatprep.subr.mxu0 0.0
        %v359 = vand.u32 %v307, 4294901760
        %360 = vmatpush1.msra.mxu0 %v359
        %361 = vmatprep.subr.mxu0 0.0
        %v362 = vand.u32 %v308, 4294901760
        %363 = vmatpush1.msra.mxu0 %v362
        %364 = vmatprep.subr.mxu0 0.0
        %v365 = vand.u32 %v309, 4294901760
        %366 = vmatpush1.msra.mxu0 %v365
        %367 = vmatprep.subr.mxu0 0.0
        %v368 = vand.u32 %v310, 4294901760
        %369 = vmatpush1.msra.mxu0 %v368
        %370 = vmatprep.subr.mxu0 0.0
        %v371 = vand.u32 %v311, 4294901760
        %372 = vmatpush1.msra.mxu0 %v371
        %373 = vmatprep.subr.mxu0 0.0
        %374 = vmatpush1.msra.mxu0 0.0
        %375 = vmatprep.subr.mxu0 0.0
        %376 = vmatpush1.msra.mxu0 0.0
        %377 = vmatprep.subr.mxu0 0.0
        %378 = vmatpush1.msra.mxu0 0.0
        %379 = vmatprep.subr.mxu0 0.0
        %380 = vmatpush1.msra.mxu0 0.0
        %381 = vmatprep.subr.mxu0 0.0
        %382 = vmatpush1.msra.mxu0 0.0
        %383 = vmatprep.subr.mxu0 0.0
        %384 = vmatpush1.msra.mxu0 0.0
        %385 = vmatprep.subr.mxu0 0.0
        %386 = vmatpush1.msra.mxu0 0.0
        %387 = vmatprep.subr.mxu0 0.0
        %388 = vmatpush1.msra.mxu0 0.0
        %389 = vmatprep.subr.mxu0 0.0
        %390 = vmatpush1.msra.mxu0 0.0
        %391 = vmatprep.subr.mxu0 0.0
        %392 = vmatpush1.msra.mxu0 0.0
        %393 = vmatprep.subr.mxu0 0.0
        %394 = vmatpush1.msra.mxu0 0.0
        %395 = vmatprep.subr.mxu0 0.0
        %396 = vmatpush1.msra.mxu0 0.0
        %397 = vmatprep.subr.mxu0 0.0
        %398 = vmatpush1.msra.mxu0 0.0
        %399 = vmatprep.subr.mxu0 0.0
        %400 = vmatpush1.msra.mxu0 0.0
        %401 = vmatprep.subr.mxu0 0.0
        %402 = vmatpush1.msra.mxu0 0.0
        %403 = vmatprep.subr.mxu0 0.0
        %404 = vmatpush1.msra.mxu0 0.0
        %405 = vmatprep.subr.mxu0 0.0
        %406 = vmatpush1.msra.mxu0 0.0
        %407 = vmatprep.subr.mxu0 0.0
        %408 = vmatpush1.msra.mxu0 0.0
        %409 = vmatprep.subr.mxu0 0.0
        %410 = vmatpush1.msra.mxu0 0.0
        %411 = vmatprep.subr.mxu0 0.0
        %412 = vmatpush1.msra.mxu0 0.0
        %413 = vmatprep.subr.mxu0 0.0
        %414 = vmatpush1.msra.mxu0 0.0
        %415 = vmatprep.subr.mxu0 0.0
        %416 = vmatpush1.msra.mxu0 0.0
        %417 = vmatprep.mubr.f32.mxu0 0.0
        %v418 = vand.u32 %v314, 4294901760
        %v419 = vsub.f32 %v314, %v418
        %v420 = vand.u32 %v419, 4294901760
        %v421 = vsub.f32 %v419, %v420
        %v422 = vand.u32 %v421, 4294901760
        %423 = vmatmul.mubr.f32.gmra.mrb[0].mxu0 %v422
        %v424 = vpop.f32.mrb[0].mxu0
        %v425 = vadd.f32 0.0, %v424
        %v426 = vpop.f32.mrb[0].mxu0
        %427 = vmatprep.mubr.f32.mxu0 0.0
        %v428 = vand.u32 %v317, 4294901760
        %v429 = vsub.f32 %v317, %v428
        %v430 = vand.u32 %v429, 4294901760
        %v431 = vsub.f32 %v429, %v430
        %v432 = vand.u32 %v431, 4294901760
        %433 = vmatmul.mubr.f32.gmra.mrb[0].mxu0 %v432
        %v434 = vpop.f32.mrb[0].mxu0
        %v435 = vadd.f32 0.0, %v434
        %v436 = vpop.f32.mrb[0].mxu0
        %437 = vmatprep.mubr.f32.mxu0 0.0
        %v438 = vand.u32 %v320, 4294901760
        %v439 = vsub.f32 %v320, %v438
        %v440 = vand.u32 %v439, 4294901760
        %v441 = vsub.f32 %v439, %v440
        %v442 = vand.u32 %v441, 4294901760
        %443 = vmatmul.mubr.f32.gmra.mrb[0].mxu0 %v442
        %v444 = vpop.f32.mrb[0].mxu0
        %v445 = vadd.f32 0.0, %v444
        %v446 = vpop.f32.mrb[0].mxu0
        %447 = vmatprep.mubr.f32.mxu0 0.0
        %v448 = vand.u32 %v323, 4294901760
        %v449 = vsub.f32 %v323, %v448
        %v450 = vand.u32 %v449, 4294901760
        %v451 = vsub.f32 %v449, %v450
        %v452 = vand.u32 %v451, 4294901760
        %453 = vmatmul.mubr.f32.gmra.mrb[0].mxu0 %v452
        %v454 = vpop.f32.mrb[0].mxu0
        %v455 = vadd.f32 0.0, %v454
        %v456 = vpop.f32.mrb[0].mxu0
        %457 = vmatprep.mubr.f32.mxu0 0.0
        %v458 = vand.u32 %v326, 4294901760
        %v459 = vsub.f32 %v326, %v458
        %v460 = vand.u32 %v459, 4294901760
        %v461 = vsub.f32 %v459, %v460
        %v462 = vand.u32 %v461, 4294901760
        %463 = vmatmul.mubr.f32.gmra.mrb[0].mxu0 %v462
        %v464 = vpop.f32.mrb[0].mxu0
        %v465 = vadd.f32 0.0, %v464
        %v466 = vpop.f32.mrb[0].mxu0
        %467 = vmatprep.mubr.f32.mxu0 0.0
        %v468 = vand.u32 %v329, 4294901760
        %v469 = vsub.f32 %v329, %v468
        %v470 = vand.u32 %v469, 4294901760
        %v471 = vsub.f32 %v469, %v470
        %v472 = vand.u32 %v471, 4294901760
        %473 = vmatmul.mubr.f32.gmra.mrb[0].mxu0 %v472
        %v474 = vpop.f32.mrb[0].mxu0
        %v475 = vadd.f32 0.0, %v474
        %v476 = vpop.f32.mrb[0].mxu0
        %477 = vmatprep.mubr.f32.mxu0 0.0
        %v478 = vand.u32 %v332, 4294901760
        %v479 = vsub.f32 %v332, %v478
        %v480 = vand.u32 %v479, 4294901760
        %v481 = vsub.f32 %v479, %v480
        %v482 = vand.u32 %v481, 4294901760
        %483 = vmatmul.mubr.f32.gmra.mrb[0].mxu0 %v482
        %v484 = vpop.f32.mrb[0].mxu0
        %v485 = vadd.f32 0.0, %v484
        %v486 = vpop.f32.mrb[0].mxu0
        %487 = vmatprep.mubr.f32.mxu0 0.0
        %v488 = vand.u32 %v335, 4294901760
        %v489 = vsub.f32 %v335, %v488
        %v490 = vand.u32 %v489, 4294901760
        %v491 = vsub.f32 %v489, %v490
        %v492 = vand.u32 %v491, 4294901760
        %493 = vmatmul.mubr.f32.gmra.mrb[0].mxu0 %v492
        %v494 = vpop.f32.mrb[0].mxu0
        %v495 = vadd.f32 0.0, %v494
        %v496 = vpop.f32.mrb[0].mxu0
        %497 = vmatprep.mubr.f32.mxu0 0.0
        %v498 = vand.u32 %v338, 4294901760
        %v499 = vsub.f32 %v338, %v498
        %v500 = vand.u32 %v499, 4294901760
        %v501 = vsub.f32 %v499, %v500
        %v502 = vand.u32 %v501, 4294901760
        %503 = vmatmul.mubr.f32.gmra.mrb[0].mxu0 %v502
        %v504 = vpop.f32.mrb[0].mxu0
        %v505 = vadd.f32 0.0, %v504
        %v506 = vpop.f32.mrb[0].mxu0
        %507 = vmatprep.mubr.f32.mxu0 0.0
        %v508 = vand.u32 %v341, 4294901760
        %v509 = vsub.f32 %v341, %v508
        %v510 = vand.u32 %v509, 4294901760
        %v511 = vsub.f32 %v509, %v510
        %v512 = vand.u32 %v511, 4294901760
        %513 = vmatmul.mubr.f32.gmra.mrb[0].mxu0 %v512
        %v514 = vpop.f32.mrb[0].mxu0
        %v515 = vadd.f32 0.0, %v514
        %v516 = vpop.f32.mrb[0].mxu0
        %517 = vdwg.mxu0
        %518 = vmatprep.subr.mxu0 0.0
        %v519 = vand.u32 %v284, 4294901760
        %v520 = vsub.f32 %v284, %v519
        %v521 = vand.u32 %v520, 4294901760
        %v522 = vsub.f32 %v520, %v521
        %v523 = vand.u32 %v522, 4294901760
        %524 = vmatpush1.msra.mxu0 %v523
        %525 = vmatprep.subr.mxu0 0.0
        %v526 = vand.u32 %v285, 4294901760
        %v527 = vsub.f32 %v285, %v526
        %v528 = vand.u32 %v527, 4294901760
        %v529 = vsub.f32 %v527, %v528
        %v530 = vand.u32 %v529, 4294901760
        %531 = vmatpush1.msra.mxu0 %v530
        %532 = vmatprep.subr.mxu0 0.0
        %v533 = vand.u32 %v286, 4294901760
        %v534 = vsub.f32 %v286, %v533
        %v535 = vand.u32 %v534, 4294901760
        %v536 = vsub.f32 %v534, %v535
        %v537 = vand.u32 %v536, 4294901760
        %538 = vmatpush1.msra.mxu0 %v537
        %539 = vmatprep.subr.mxu0 0.0
        %v540 = vand.u32 %v287, 4294901760
        %v541 = vsub.f32 %v287, %v540
        %v542 = vand.u32 %v541, 4294901760
        %v543 = vsub.f32 %v541, %v542
        %v544 = vand.u32 %v543, 4294901760
        %545 = vmatpush1.msra.mxu0 %v544
        %546 = vmatprep.subr.mxu0 0.0
        %v547 = vand.u32 %v306, 4294901760
        %v548 = vsub.f32 %v306, %v547
        %v549 = vand.u32 %v548, 4294901760
        %v550 = vsub.f32 %v548, %v549
        %v551 = vand.u32 %v550, 4294901760
        %552 = vmatpush1.msra.mxu0 %v551
        %553 = vmatprep.subr.mxu0 0.0
        %v554 = vand.u32 %v307, 4294901760
        %v555 = vsub.f32 %v307, %v554
        %v556 = vand.u32 %v555, 4294901760
        %v557 = vsub.f32 %v555, %v556
        %v558 = vand.u32 %v557, 4294901760
        %559 = vmatpush1.msra.mxu0 %v558
        %560 = vmatprep.subr.mxu0 0.0
        %v561 = vand.u32 %v308, 4294901760
        %v562 = vsub.f32 %v308, %v561
        %v563 = vand.u32 %v562, 4294901760
        %v564 = vsub.f32 %v562, %v563
        %v565 = vand.u32 %v564, 4294901760
        %566 = vmatpush1.msra.mxu0 %v565
        %567 = vmatprep.subr.mxu0 0.0
        %v568 = vand.u32 %v309, 4294901760
        %v569 = vsub.f32 %v309, %v568
        %v570 = vand.u32 %v569, 4294901760
        %v571 = vsub.f32 %v569, %v570
        %v572 = vand.u32 %v571, 4294901760
        %573 = vmatpush1.msra.mxu0 %v572
        %574 = vmatprep.subr.mxu0 0.0
        %v575 = vand.u32 %v310, 4294901760
        %v576 = vsub.f32 %v310, %v575
        %v577 = vand.u32 %v576, 4294901760
        %v578 = vsub.f32 %v576, %v577
        %v579 = vand.u32 %v578, 4294901760
        %580 = vmatpush1.msra.mxu0 %v579
        %581 = vmatprep.subr.mxu0 0.0
        %v582 = vand.u32 %v311, 4294901760
        %v583 = vsub.f32 %v311, %v582
        %v584 = vand.u32 %v583, 4294901760
        %v585 = vsub.f32 %v583, %v584
        %v586 = vand.u32 %v585, 4294901760
        %587 = vmatpush1.msra.mxu0 %v586
        %588 = vmatprep.subr.mxu0 0.0
        %589 = vmatpush1.msra.mxu0 0.0
        %590 = vmatprep.subr.mxu0 0.0
        %591 = vmatpush1.msra.mxu0 0.0
        %592 = vmatprep.subr.mxu0 0.0
        %593 = vmatpush1.msra.mxu0 0.0
        %594 = vmatprep.subr.mxu0 0.0
        %595 = vmatpush1.msra.mxu0 0.0
        %596 = vmatprep.subr.mxu0 0.0
        %597 = vmatpush1.msra.mxu0 0.0
        %598 = vmatprep.subr.mxu0 0.0
        %599 = vmatpush1.msra.mxu0 0.0
        %600 = vmatprep.subr.mxu0 0.0
        %601 = vmatpush1.msra.mxu0 0.0
        %602 = vmatprep.subr.mxu0 0.0
        %603 = vmatpush1.msra.mxu0 0.0
        %604 = vmatprep.subr.mxu0 0.0
        %605 = vmatpush1.msra.mxu0 0.0
        %606 = vmatprep.subr.mxu0 0.0
        %607 = vmatpush1.msra.mxu0 0.0
        %608 = vmatprep.subr.mxu0 0.0
        %609 = vmatpush1.msra.mxu0 0.0
        %610 = vmatprep.subr.mxu0 0.0
        %611 = vmatpush1.msra.mxu0 0.0
        %612 = vmatprep.subr.mxu0 0.0
        %613 = vmatpush1.msra.mxu0 0.0
        %614 = vmatprep.subr.mxu0 0.0
        %615 = vmatpush1.msra.mxu0 0.0
        %616 = vmatprep.subr.mxu0 0.0
        %617 = vmatpush1.msra.mxu0 0.0
        %618 = vmatprep.subr.mxu0 0.0
        %619 = vmatpush1.msra.mxu0 0.0
        %620 = vmatprep.subr.mxu0 0.0
        %621 = vmatpush1.msra.mxu0 0.0
        %622 = vmatprep.subr.mxu0 0.0
        %623 = vmatpush1.msra.mxu0 0.0
        %624 = vmatprep.subr.mxu0 0.0
        %625 = vmatpush1.msra.mxu0 0.0
        %626 = vmatprep.subr.mxu0 0.0
        %627 = vmatpush1.msra.mxu0 0.0
        %628 = vmatprep.subr.mxu0 0.0
        %629 = vmatpush1.msra.mxu0 0.0
        %630 = vmatprep.subr.mxu0 0.0
        %631 = vmatpush1.msra.mxu0 0.0
        %632 = vmatprep.mubr.f32.mxu0 0.0
        %v633 = vand.u32 %v314, 4294901760
        %634 = vmatmul.mubr.f32.gmra.mrb[0].mxu0 %v633
        %v635 = vpop.f32.mrb[0].mxu0
        %v636 = vadd.f32 %v425, %v635
        %v637 = vpop.f32.mrb[0].mxu0
        %638 = vmatprep.mubr.f32.mxu0 0.0
        %v639 = vand.u32 %v317, 4294901760
        %640 = vmatmul.mubr.f32.gmra.mrb[0].mxu0 %v639
        %v641 = vpop.f32.mrb[0].mxu0
        %v642 = vadd.f32 %v435, %v641
        %v643 = vpop.f32.mrb[0].mxu0
        %644 = vmatprep.mubr.f32.mxu0 0.0
        %v645 = vand.u32 %v320, 4294901760
        %646 = vmatmul.mubr.f32.gmra.mrb[0].mxu0 %v645
        %v647 = vpop.f32.mrb[0].mxu0
        %v648 = vadd.f32 %v445, %v647
        %v649 = vpop.f32.mrb[0].mxu0
        %650 = vmatprep.mubr.f32.mxu0 0.0
        %v651 = vand.u32 %v323, 4294901760
        %652 = vmatmul.mubr.f32.gmra.mrb[0].mxu0 %v651
        %v653 = vpop.f32.mrb[0].mxu0
        %v654 = vadd.f32 %v455, %v653
        %v655 = vpop.f32.mrb[0].mxu0
        %656 = vmatprep.mubr.f32.mxu0 0.0
        %v657 = vand.u32 %v326, 4294901760
        %658 = vmatmul.mubr.f32.gmra.mrb[0].mxu0 %v657
        %v659 = vpop.f32.mrb[0].mxu0
        %v660 = vadd.f32 %v465, %v659
        %v661 = vpop.f32.mrb[0].mxu0
        %662 = vmatprep.mubr.f32.mxu0 0.0
        %v663 = vand.u32 %v329, 4294901760
        %664 = vmatmul.mubr.f32.gmra.mrb[0].mxu0 %v663
        %v665 = vpop.f32.mrb[0].mxu0
        %v666 = vadd.f32 %v475, %v665
        %v667 = vpop.f32.mrb[0].mxu0
        %668 = vmatprep.mubr.f32.mxu0 0.0
        %v669 = vand.u32 %v332, 4294901760
        %670 = vmatmul.mubr.f32.gmra.mrb[0].mxu0 %v669
        %v671 = vpop.f32.mrb[0].mxu0
        %v672 = vadd.f32 %v485, %v671
        %v673 = vpop.f32.mrb[0].mxu0
        %674 = vmatprep.mubr.f32.mxu0 0.0
        %v675 = vand.u32 %v335, 4294901760
        %676 = vmatmul.mubr.f32.gmra.mrb[0].mxu0 %v675
        %v677 = vpop.f32.mrb[0].mxu0
        %v678 = vadd.f32 %v495, %v677
        %v679 = vpop.f32.mrb[0].mxu0
        %680 = vmatprep.mubr.f32.mxu0 0.0
        %v681 = vand.u32 %v338, 4294901760
        %682 = vmatmul.mubr.f32.gmra.mrb[0].mxu0 %v681
        %v683 = vpop.f32.mrb[0].mxu0
        %v684 = vadd.f32 %v505, %v683
        %v685 = vpop.f32.mrb[0].mxu0
        %686 = vmatprep.mubr.f32.mxu0 0.0
        %v687 = vand.u32 %v341, 4294901760
        %688 = vmatmul.mubr.f32.gmra.mrb[0].mxu0 %v687
        %v689 = vpop.f32.mrb[0].mxu0
        %v690 = vadd.f32 %v515, %v689
        %v691 = vpop.f32.mrb[0].mxu0
        %692 = vdwg.mxu0
        %693 = vmatprep.subr.mxu0 0.0
        %v694 = vand.u32 %v284, 4294901760
        %v695 = vsub.f32 %v284, %v694
        %696 = vmatpush1.msra.mxu0 %v695
        %697 = vmatprep.subr.mxu0 0.0
        %v698 = vand.u32 %v285, 4294901760
        %v699 = vsub.f32 %v285, %v698
        %700 = vmatpush1.msra.mxu0 %v699
        %701 = vmatprep.subr.mxu0 0.0
        %v702 = vand.u32 %v286, 4294901760
        %v703 = vsub.f32 %v286, %v702
        %704 = vmatpush1.msra.mxu0 %v703
        %705 = vmatprep.subr.mxu0 0.0
        %v706 = vand.u32 %v287, 4294901760
        %v707 = vsub.f32 %v287, %v706
        %708 = vmatpush1.msra.mxu0 %v707
        %709 = vmatprep.subr.mxu0 0.0
        %v710 = vand.u32 %v306, 4294901760
        %v711 = vsub.f32 %v306, %v710
        %712 = vmatpush1.msra.mxu0 %v711
        %713 = vmatprep.subr.mxu0 0.0
        %v714 = vand.u32 %v307, 4294901760
        %v715 = vsub.f32 %v307, %v714
        %716 = vmatpush1.msra.mxu0 %v715
        %717 = vmatprep.subr.mxu0 0.0
        %v718 = vand.u32 %v308, 4294901760
        %v719 = vsub.f32 %v308, %v718
        %720 = vmatpush1.msra.mxu0 %v719
        %721 = vmatprep.subr.mxu0 0.0
        %v722 = vand.u32 %v309, 4294901760
        %v723 = vsub.f32 %v309, %v722
        %724 = vmatpush1.msra.mxu0 %v723
        %725 = vmatprep.subr.mxu0 0.0
        %v726 = vand.u32 %v310, 4294901760
        %v727 = vsub.f32 %v310, %v726
        %728 = vmatpush1.msra.mxu0 %v727
        %729 = vmatprep.subr.mxu0 0.0
        %v730 = vand.u32 %v311, 4294901760
        %v731 = vsub.f32 %v311, %v730
        %732 = vmatpush1.msra.mxu0 %v731
        %733 = vmatprep.subr.mxu0 0.0
        %734 = vmatpush1.msra.mxu0 0.0
        %735 = vmatprep.subr.mxu0 0.0
        %736 = vmatpush1.msra.mxu0 0.0
        %737 = vmatprep.subr.mxu0 0.0
        %738 = vmatpush1.msra.mxu0 0.0
        %739 = vmatprep.subr.mxu0 0.0
        %740 = vmatpush1.msra.mxu0 0.0
        %741 = vmatprep.subr.mxu0 0.0
        %742 = vmatpush1.msra.mxu0 0.0
        %743 = vmatprep.subr.mxu0 0.0
        %744 = vmatpush1.msra.mxu0 0.0
        %745 = vmatprep.subr.mxu0 0.0
        %746 = vmatpush1.msra.mxu0 0.0
        %747 = vmatprep.subr.mxu0 0.0
        %748 = vmatpush1.msra.mxu0 0.0
        %749 = vmatprep.subr.mxu0 0.0
        %750 = vmatpush1.msra.mxu0 0.0
        %751 = vmatprep.subr.mxu0 0.0
        %752 = vmatpush1.msra.mxu0 0.0
        %753 = vmatprep.subr.mxu0 0.0
        %754 = vmatpush1.msra.mxu0 0.0
        %755 = vmatprep.subr.mxu0 0.0
        %756 = vmatpush1.msra.mxu0 0.0
        %757 = vmatprep.subr.mxu0 0.0
        %758 = vmatpush1.msra.mxu0 0.0
        %759 = vmatprep.subr.mxu0 0.0
        %760 = vmatpush1.msra.mxu0 0.0
        %761 = vmatprep.subr.mxu0 0.0
        %762 = vmatpush1.msra.mxu0 0.0
        %763 = vmatprep.subr.mxu0 0.0
        %764 = vmatpush1.msra.mxu0 0.0
        %765 = vmatprep.subr.mxu0 0.0
        %766 = vmatpush1.msra.mxu0 0.0
        %767 = vmatprep.subr.mxu0 0.0
        %768 = vmatpush1.msra.mxu0 0.0
        %769 = vmatprep.subr.mxu0 0.0
        %770 = vmatpush1.msra.mxu0 0.0
        %771 = vmatprep.subr.mxu0 0.0
        %772 = vmatpush1.msra.mxu0 0.0
        %773 = vmatprep.subr.mxu0 0.0
        %774 = vmatpush1.msra.mxu0 0.0
        %775 = vmatprep.subr.mxu0 0.0
        %776 = vmatpush1.msra.mxu0 0.0
        %777 = vmatprep.mubr.f32.mxu0 0.0
        %v778 = vand.u32 %v314, 4294901760
        %v779 = vsub.f32 %v314, %v778
        %780 = vmatmul.mubr.f32.gmra.mrb[0].mxu0 %v779
        %v781 = vpop.f32.mrb[0].mxu0
        %v782 = vadd.f32 %v636, %v781
        %v783 = vpop.f32.mrb[0].mxu0
        %784 = vmatprep.mubr.f32.mxu0 0.0
        %v785 = vand.u32 %v317, 4294901760
        %v786 = vsub.f32 %v317, %v785
        %787 = vmatmul.mubr.f32.gmra.mrb[0].mxu0 %v786
        %v788 = vpop.f32.mrb[0].mxu0
        %v789 = vadd.f32 %v642, %v788
        %v790 = vpop.f32.mrb[0].mxu0
        %791 = vmatprep.mubr.f32.mxu0 0.0
        %v792 = vand.u32 %v320, 4294901760
        %v793 = vsub.f32 %v320, %v792
        %794 = vmatmul.mubr.f32.gmra.mrb[0].mxu0 %v793
        %v795 = vpop.f32.mrb[0].mxu0
        %v796 = vadd.f32 %v648, %v795
        %v797 = vpop.f32.mrb[0].mxu0
        %798 = vmatprep.mubr.f32.mxu0 0.0
        %v799 = vand.u32 %v323, 4294901760
        %v800 = vsub.f32 %v323, %v799
        %801 = vmatmul.mubr.f32.gmra.mrb[0].mxu0 %v800
        %v802 = vpop.f32.mrb[0].mxu0
        %v803 = vadd.f32 %v654, %v802
        %v804 = vpop.f32.mrb[0].mxu0
        %805 = vmatprep.mubr.f32.mxu0 0.0
        %v806 = vand.u32 %v326, 4294901760
        %v807 = vsub.f32 %v326, %v806
        %808 = vmatmul.mubr.f32.gmra.mrb[0].mxu0 %v807
        %v809 = vpop.f32.mrb[0].mxu0
        %v810 = vadd.f32 %v660, %v809
        %v811 = vpop.f32.mrb[0].mxu0
        %812 = vmatprep.mubr.f32.mxu0 0.0
        %v813 = vand.u32 %v329, 4294901760
        %v814 = vsub.f32 %v329, %v813
        %815 = vmatmul.mubr.f32.gmra.mrb[0].mxu0 %v814
        %v816 = vpop.f32.mrb[0].mxu0
        %v817 = vadd.f32 %v666, %v816
        %v818 = vpop.f32.mrb[0].mxu0
        %819 = vmatprep.mubr.f32.mxu0 0.0
        %v820 = vand.u32 %v332, 4294901760
        %v821 = vsub.f32 %v332, %v820
        %822 = vmatmul.mubr.f32.gmra.mrb[0].mxu0 %v821
        %v823 = vpop.f32.mrb[0].mxu0
        %v824 = vadd.f32 %v672, %v823
        %v825 = vpop.f32.mrb[0].mxu0
        %826 = vmatprep.mubr.f32.mxu0 0.0
        %v827 = vand.u32 %v335, 4294901760
        %v828 = vsub.f32 %v335, %v827
        %829 = vmatmul.mubr.f32.gmra.mrb[0].mxu0 %v828
        %v830 = vpop.f32.mrb[0].mxu0
        %v831 = vadd.f32 %v678, %v830
        %v832 = vpop.f32.mrb[0].mxu0
        %833 = vmatprep.mubr.f32.mxu0 0.0
        %v834 = vand.u32 %v338, 4294901760
        %v835 = vsub.f32 %v338, %v834
        %836 = vmatmul.mubr.f32.gmra.mrb[0].mxu0 %v835
        %v837 = vpop.f32.mrb[0].mxu0
        %v838 = vadd.f32 %v684, %v837
        %v839 = vpop.f32.mrb[0].mxu0
        %840 = vmatprep.mubr.f32.mxu0 0.0
        %v841 = vand.u32 %v341, 4294901760
        %v842 = vsub.f32 %v341, %v841
        %843 = vmatmul.mubr.f32.gmra.mrb[0].mxu0 %v842
        %v844 = vpop.f32.mrb[0].mxu0
        %v845 = vadd.f32 %v690, %v844
        %v846 = vpop.f32.mrb[0].mxu0
        %847 = vdwg.mxu0
        %848 = vmatprep.subr.mxu0 0.0
        %v849 = vand.u32 %v284, 4294901760
        %850 = vmatpush1.msra.mxu0 %v849
        %851 = vmatprep.subr.mxu0 0.0
        %v852 = vand.u32 %v285, 4294901760
        %853 = vmatpush1.msra.mxu0 %v852
        %854 = vmatprep.subr.mxu0 0.0
        %v855 = vand.u32 %v286, 4294901760
        %856 = vmatpush1.msra.mxu0 %v855
        %857 = vmatprep.subr.mxu0 0.0
        %v858 = vand.u32 %v287, 4294901760
        %859 = vmatpush1.msra.mxu0 %v858
        %860 = vmatprep.subr.mxu0 0.0
        %v861 = vand.u32 %v306, 4294901760
        %862 = vmatpush1.msra.mxu0 %v861
        %863 = vmatprep.subr.mxu0 0.0
        %v864 = vand.u32 %v307, 4294901760
        %865 = vmatpush1.msra.mxu0 %v864
        %866 = vmatprep.subr.mxu0 0.0
        %v867 = vand.u32 %v308, 4294901760
        %868 = vmatpush1.msra.mxu0 %v867
        %869 = vmatprep.subr.mxu0 0.0
        %v870 = vand.u32 %v309, 4294901760
        %871 = vmatpush1.msra.mxu0 %v870
        %872 = vmatprep.subr.mxu0 0.0
        %v873 = vand.u32 %v310, 4294901760
        %874 = vmatpush1.msra.mxu0 %v873
        %875 = vmatprep.subr.mxu0 0.0
        %v876 = vand.u32 %v311, 4294901760
        %877 = vmatpush1.msra.mxu0 %v876
        %878 = vmatprep.subr.mxu0 0.0
        %879 = vmatpush1.msra.mxu0 0.0
        %880 = vmatprep.subr.mxu0 0.0
        %881 = vmatpush1.msra.mxu0 0.0
        %882 = vmatprep.subr.mxu0 0.0
        %883 = vmatpush1.msra.mxu0 0.0
        %884 = vmatprep.subr.mxu0 0.0
        %885 = vmatpush1.msra.mxu0 0.0
        %886 = vmatprep.subr.mxu0 0.0
        %887 = vmatpush1.msra.mxu0 0.0
        %888 = vmatprep.subr.mxu0 0.0
        %889 = vmatpush1.msra.mxu0 0.0
        %890 = vmatprep.subr.mxu0 0.0
        %891 = vmatpush1.msra.mxu0 0.0
        %892 = vmatprep.subr.mxu0 0.0
        %893 = vmatpush1.msra.mxu0 0.0
        %894 = vmatprep.subr.mxu0 0.0
        %895 = vmatpush1.msra.mxu0 0.0
        %896 = vmatprep.subr.mxu0 0.0
        %897 = vmatpush1.msra.mxu0 0.0
        %898 = vmatprep.subr.mxu0 0.0
        %899 = vmatpush1.msra.mxu0 0.0
        %900 = vmatprep.subr.mxu0 0.0
        %901 = vmatpush1.msra.mxu0 0.0
        %902 = vmatprep.subr.mxu0 0.0
        %903 = vmatpush1.msra.mxu0 0.0
        %904 = vmatprep.subr.mxu0 0.0
        %905 = vmatpush1.msra.mxu0 0.0
        %906 = vmatprep.subr.mxu0 0.0
        %907 = vmatpush1.msra.mxu0 0.0
        %908 = vmatprep.subr.mxu0 0.0
        %909 = vmatpush1.msra.mxu0 0.0
        %910 = vmatprep.subr.mxu0 0.0
        %911 = vmatpush1.msra.mxu0 0.0
        %912 = vmatprep.subr.mxu0 0.0
        %913 = vmatpush1.msra.mxu0 0.0
        %914 = vmatprep.subr.mxu0 0.0
        %915 = vmatpush1.msra.mxu0 0.0
        %916 = vmatprep.subr.mxu0 0.0
        %917 = vmatpush1.msra.mxu0 0.0
        %918 = vmatprep.subr.mxu0 0.0
        %919 = vmatpush1.msra.mxu0 0.0
        %920 = vmatprep.subr.mxu0 0.0
        %921 = vmatpush1.msra.mxu0 0.0
        %922 = vmatprep.mubr.f32.mxu0 0.0
        %v923 = vand.u32 %v314, 4294901760
        %v924 = vsub.f32 %v314, %v923
        %v925 = vand.u32 %v924, 4294901760
        %926 = vmatmul.mubr.f32.gmra.mrb[0].mxu0 %v925
        %v927 = vpop.f32.mrb[0].mxu0
        %v928 = vadd.f32 %v782, %v927
        %v929 = vpop.f32.mrb[0].mxu0
        %930 = vmatprep.mubr.f32.mxu0 0.0
        %v931 = vand.u32 %v317, 4294901760
        %v932 = vsub.f32 %v317, %v931
        %v933 = vand.u32 %v932, 4294901760
        %934 = vmatmul.mubr.f32.gmra.mrb[0].mxu0 %v933
        %v935 = vpop.f32.mrb[0].mxu0
        %v936 = vadd.f32 %v789, %v935
        %v937 = vpop.f32.mrb[0].mxu0
        %938 = vmatprep.mubr.f32.mxu0 0.0
        %v939 = vand.u32 %v320, 4294901760
        %v940 = vsub.f32 %v320, %v939
        %v941 = vand.u32 %v940, 4294901760
        %942 = vmatmul.mubr.f32.gmra.mrb[0].mxu0 %v941
        %v943 = vpop.f32.mrb[0].mxu0
        %v944 = vadd.f32 %v796, %v943
        %v945 = vpop.f32.mrb[0].mxu0
        %946 = vmatprep.mubr.f32.mxu0 0.0
        %v947 = vand.u32 %v323, 4294901760
        %v948 = vsub.f32 %v323, %v947
        %v949 = vand.u32 %v948, 4294901760
        %950 = vmatmul.mubr.f32.gmra.mrb[0].mxu0 %v949
        %v951 = vpop.f32.mrb[0].mxu0
        %v952 = vadd.f32 %v803, %v951
        %v953 = vpop.f32.mrb[0].mxu0
        %954 = vmatprep.mubr.f32.mxu0 0.0
        %v955 = vand.u32 %v326, 4294901760
        %v956 = vsub.f32 %v326, %v955
        %v957 = vand.u32 %v956, 4294901760
        %958 = vmatmul.mubr.f32.gmra.mrb[0].mxu0 %v957
        %v959 = vpop.f32.mrb[0].mxu0
        %v960 = vadd.f32 %v810, %v959
        %v961 = vpop.f32.mrb[0].mxu0
        %962 = vmatprep.mubr.f32.mxu0 0.0
        %v963 = vand.u32 %v329, 4294901760
        %v964 = vsub.f32 %v329, %v963
        %v965 = vand.u32 %v964, 4294901760
        %966 = vmatmul.mubr.f32.gmra.mrb[0].mxu0 %v965
        %v967 = vpop.f32.mrb[0].mxu0
        %v968 = vadd.f32 %v817, %v967
        %v969 = vpop.f32.mrb[0].mxu0
        %970 = vmatprep.mubr.f32.mxu0 0.0
        %v971 = vand.u32 %v332, 4294901760
        %v972 = vsub.f32 %v332, %v971
        %v973 = vand.u32 %v972, 4294901760
        %974 = vmatmul.mubr.f32.gmra.mrb[0].mxu0 %v973
        %v975 = vpop.f32.mrb[0].mxu0
        %v976 = vadd.f32 %v824, %v975
        %v977 = vpop.f32.mrb[0].mxu0
        %978 = vmatprep.mubr.f32.mxu0 0.0
        %v979 = vand.u32 %v335, 4294901760
        %v980 = vsub.f32 %v335, %v979
        %v981 = vand.u32 %v980, 4294901760
        %982 = vmatmul.mubr.f32.gmra.mrb[0].mxu0 %v981
        %v983 = vpop.f32.mrb[0].mxu0
        %v984 = vadd.f32 %v831, %v983
        %v985 = vpop.f32.mrb[0].mxu0
        %986 = vmatprep.mubr.f32.mxu0 0.0
        %v987 = vand.u32 %v338, 4294901760
        %v988 = vsub.f32 %v338, %v987
        %v989 = vand.u32 %v988, 4294901760
        %990 = vmatmul.mubr.f32.gmra.mrb[0].mxu0 %v989
        %v991 = vpop.f32.mrb[0].mxu0
        %v992 = vadd.f32 %v838, %v991
        %v993 = vpop.f32.mrb[0].mxu0
        %994 = vmatprep.mubr.f32.mxu0 0.0
        %v995 = vand.u32 %v341, 4294901760
        %v996 = vsub.f32 %v341, %v995
        %v997 = vand.u32 %v996, 4294901760
        %998 = vmatmul.mubr.f32.gmra.mrb[0].mxu0 %v997
        %v999 = vpop.f32.mrb[0].mxu0
        %v1000 = vadd.f32 %v845, %v999
        %v1001 = vpop.f32.mrb[0].mxu0
        %1002 = vdwg.mxu0
        %1003 = vmatprep.subr.mxu0 0.0
        %v1004 = vand.u32 %v284, 4294901760
        %v1005 = vsub.f32 %v284, %v1004
        %v1006 = vand.u32 %v1005, 4294901760
        %1007 = vmatpush1.msra.mxu0 %v1006
        %1008 = vmatprep.subr.mxu0 0.0
        %v1009 = vand.u32 %v285, 4294901760
        %v1010 = vsub.f32 %v285, %v1009
        %v1011 = vand.u32 %v1010, 4294901760
        %1012 = vmatpush1.msra.mxu0 %v1011
        %1013 = vmatprep.subr.mxu0 0.0
        %v1014 = vand.u32 %v286, 4294901760
        %v1015 = vsub.f32 %v286, %v1014
        %v1016 = vand.u32 %v1015, 4294901760
        %1017 = vmatpush1.msra.mxu0 %v1016
        %1018 = vmatprep.subr.mxu0 0.0
        %v1019 = vand.u32 %v287, 4294901760
        %v1020 = vsub.f32 %v287, %v1019
        %v1021 = vand.u32 %v1020, 4294901760
        %1022 = vmatpush1.msra.mxu0 %v1021
        %1023 = vmatprep.subr.mxu0 0.0
        %v1024 = vand.u32 %v306, 4294901760
        %v1025 = vsub.f32 %v306, %v1024
        %v1026 = vand.u32 %v1025, 4294901760
        %1027 = vmatpush1.msra.mxu0 %v1026
        %1028 = vmatprep.subr.mxu0 0.0
        %v1029 = vand.u32 %v307, 4294901760
        %v1030 = vsub.f32 %v307, %v1029
        %v1031 = vand.u32 %v1030, 4294901760
        %1032 = vmatpush1.msra.mxu0 %v1031
        %1033 = vmatprep.subr.mxu0 0.0
        %v1034 = vand.u32 %v308, 4294901760
        %v1035 = vsub.f32 %v308, %v1034
        %v1036 = vand.u32 %v1035, 4294901760
        %1037 = vmatpush1.msra.mxu0 %v1036
        %1038 = vmatprep.subr.mxu0 0.0
        %v1039 = vand.u32 %v309, 4294901760
        %v1040 = vsub.f32 %v309, %v1039
        %v1041 = vand.u32 %v1040, 4294901760
        %1042 = vmatpush1.msra.mxu0 %v1041
        %1043 = vmatprep.subr.mxu0 0.0
        %v1044 = vand.u32 %v310, 4294901760
        %v1045 = vsub.f32 %v310, %v1044
        %v1046 = vand.u32 %v1045, 4294901760
        %1047 = vmatpush1.msra.mxu0 %v1046
        %1048 = vmatprep.subr.mxu0 0.0
        %v1049 = vand.u32 %v311, 4294901760
        %v1050 = vsub.f32 %v311, %v1049
        %v1051 = vand.u32 %v1050, 4294901760
        %1052 = vmatpush1.msra.mxu0 %v1051
        %1053 = vmatprep.subr.mxu0 0.0
        %1054 = vmatpush1.msra.mxu0 0.0
        %1055 = vmatprep.subr.mxu0 0.0
        %1056 = vmatpush1.msra.mxu0 0.0
        %1057 = vmatprep.subr.mxu0 0.0
        %1058 = vmatpush1.msra.mxu0 0.0
        %1059 = vmatprep.subr.mxu0 0.0
        %1060 = vmatpush1.msra.mxu0 0.0
        %1061 = vmatprep.subr.mxu0 0.0
        %1062 = vmatpush1.msra.mxu0 0.0
        %1063 = vmatprep.subr.mxu0 0.0
        %1064 = vmatpush1.msra.mxu0 0.0
        %1065 = vmatprep.subr.mxu0 0.0
        %1066 = vmatpush1.msra.mxu0 0.0
        %1067 = vmatprep.subr.mxu0 0.0
        %1068 = vmatpush1.msra.mxu0 0.0
        %1069 = vmatprep.subr.mxu0 0.0
        %1070 = vmatpush1.msra.mxu0 0.0
        %1071 = vmatprep.subr.mxu0 0.0
        %1072 = vmatpush1.msra.mxu0 0.0
        %1073 = vmatprep.subr.mxu0 0.0
        %1074 = vmatpush1.msra.mxu0 0.0
        %1075 = vmatprep.subr.mxu0 0.0
        %1076 = vmatpush1.msra.mxu0 0.0
        %1077 = vmatprep.subr.mxu0 0.0
        %1078 = vmatpush1.msra.mxu0 0.0
        %1079 = vmatprep.subr.mxu0 0.0
        %1080 = vmatpush1.msra.mxu0 0.0
        %1081 = vmatprep.subr.mxu0 0.0
        %1082 = vmatpush1.msra.mxu0 0.0
        %1083 = vmatprep.subr.mxu0 0.0
        %1084 = vmatpush1.msra.mxu0 0.0
        %1085 = vmatprep.subr.mxu0 0.0
        %1086 = vmatpush1.msra.mxu0 0.0
        %1087 = vmatprep.subr.mxu0 0.0
        %1088 = vmatpush1.msra.mxu0 0.0
        %1089 = vmatprep.subr.mxu0 0.0
        %1090 = vmatpush1.msra.mxu0 0.0
        %1091 = vmatprep.subr.mxu0 0.0
        %1092 = vmatpush1.msra.mxu0 0.0
        %1093 = vmatprep.subr.mxu0 0.0
        %1094 = vmatpush1.msra.mxu0 0.0
        %1095 = vmatprep.subr.mxu0 0.0
        %1096 = vmatpush1.msra.mxu0 0.0
        %1097 = vmatprep.mubr.f32.mxu0 0.0
        %v1098 = vand.u32 %v314, 4294901760
        %1099 = vmatmul.mubr.f32.gmra.mrb[0].mxu0 %v1098
        %v1100 = vpop.f32.mrb[0].mxu0
        %v1101 = vadd.f32 %v928, %v1100
        %v1102 = vpop.f32.mrb[0].mxu0
        %1103 = vmatprep.mubr.f32.mxu0 0.0
        %v1104 = vand.u32 %v317, 4294901760
        %1105 = vmatmul.mubr.f32.gmra.mrb[0].mxu0 %v1104
        %v1106 = vpop.f32.mrb[0].mxu0
        %v1107 = vadd.f32 %v936, %v1106
        %v1108 = vpop.f32.mrb[0].mxu0
        %1109 = vmatprep.mubr.f32.mxu0 0.0
        %v1110 = vand.u32 %v320, 4294901760
        %1111 = vmatmul.mubr.f32.gmra.mrb[0].mxu0 %v1110
        %v1112 = vpop.f32.mrb[0].mxu0
        %v1113 = vadd.f32 %v944, %v1112
        %v1114 = vpop.f32.mrb[0].mxu0
        %1115 = vmatprep.mubr.f32.mxu0 0.0
        %v1116 = vand.u32 %v323, 4294901760
        %1117 = vmatmul.mubr.f32.gmra.mrb[0].mxu0 %v1116
        %v1118 = vpop.f32.mrb[0].mxu0
        %v1119 = vadd.f32 %v952, %v1118
        %v1120 = vpop.f32.mrb[0].mxu0
        %1121 = vmatprep.mubr.f32.mxu0 0.0
        %v1122 = vand.u32 %v326, 4294901760
        %1123 = vmatmul.mubr.f32.gmra.mrb[0].mxu0 %v1122
        %v1124 = vpop.f32.mrb[0].mxu0
        %v1125 = vadd.f32 %v960, %v1124
        %v1126 = vpop.f32.mrb[0].mxu0
        %1127 = vmatprep.mubr.f32.mxu0 0.0
        %v1128 = vand.u32 %v329, 4294901760
        %1129 = vmatmul.mubr.f32.gmra.mrb[0].mxu0 %v1128
        %v1130 = vpop.f32.mrb[0].mxu0
        %v1131 = vadd.f32 %v968, %v1130
        %v1132 = vpop.f32.mrb[0].mxu0
        %1133 = vmatprep.mubr.f32.mxu0 0.0
        %v1134 = vand.u32 %v332, 4294901760
        %1135 = vmatmul.mubr.f32.gmra.mrb[0].mxu0 %v1134
        %v1136 = vpop.f32.mrb[0].mxu0
        %v1137 = vadd.f32 %v976, %v1136
        %v1138 = vpop.f32.mrb[0].mxu0
        %1139 = vmatprep.mubr.f32.mxu0 0.0
        %v1140 = vand.u32 %v335, 4294901760
        %1141 = vmatmul.mubr.f32.gmra.mrb[0].mxu0 %v1140
        %v1142 = vpop.f32.mrb[0].mxu0
        %v1143 = vadd.f32 %v984, %v1142
        %v1144 = vpop.f32.mrb[0].mxu0
        %1145 = vmatprep.mubr.f32.mxu0 0.0
        %v1146 = vand.u32 %v338, 4294901760
        %1147 = vmatmul.mubr.f32.gmra.mrb[0].mxu0 %v1146
        %v1148 = vpop.f32.mrb[0].mxu0
        %v1149 = vadd.f32 %v992, %v1148
        %v1150 = vpop.f32.mrb[0].mxu0
        %1151 = vmatprep.mubr.f32.mxu0 0.0
        %v1152 = vand.u32 %v341, 4294901760
        %1153 = vmatmul.mubr.f32.gmra.mrb[0].mxu0 %v1152
        %v1154 = vpop.f32.mrb[0].mxu0
        %v1155 = vadd.f32 %v1000, %v1154
        %v1156 = vpop.f32.mrb[0].mxu0
        %1157 = vdwg.mxu0
        %1158 = vmatprep.subr.mxu0 0.0
        %v1159 = vand.u32 %v284, 4294901760
        %1160 = vmatpush1.msra.mxu0 %v1159
        %1161 = vmatprep.subr.mxu0 0.0
        %v1162 = vand.u32 %v285, 4294901760
        %1163 = vmatpush1.msra.mxu0 %v1162
        %1164 = vmatprep.subr.mxu0 0.0
        %v1165 = vand.u32 %v286, 4294901760
        %1166 = vmatpush1.msra.mxu0 %v1165
        %1167 = vmatprep.subr.mxu0 0.0
        %v1168 = vand.u32 %v287, 4294901760
        %1169 = vmatpush1.msra.mxu0 %v1168
        %1170 = vmatprep.subr.mxu0 0.0
        %v1171 = vand.u32 %v306, 4294901760
        %1172 = vmatpush1.msra.mxu0 %v1171
        %1173 = vmatprep.subr.mxu0 0.0
        %v1174 = vand.u32 %v307, 4294901760
        %1175 = vmatpush1.msra.mxu0 %v1174
        %1176 = vmatprep.subr.mxu0 0.0
        %v1177 = vand.u32 %v308, 4294901760
        %1178 = vmatpush1.msra.mxu0 %v1177
        %1179 = vmatprep.subr.mxu0 0.0
        %v1180 = vand.u32 %v309, 4294901760
        %1181 = vmatpush1.msra.mxu0 %v1180
        %1182 = vmatprep.subr.mxu0 0.0
        %v1183 = vand.u32 %v310, 4294901760
        %1184 = vmatpush1.msra.mxu0 %v1183
        %1185 = vmatprep.subr.mxu0 0.0
        %v1186 = vand.u32 %v311, 4294901760
        %1187 = vmatpush1.msra.mxu0 %v1186
        %1188 = vmatprep.subr.mxu0 0.0
        %1189 = vmatpush1.msra.mxu0 0.0
        %1190 = vmatprep.subr.mxu0 0.0
        %1191 = vmatpush1.msra.mxu0 0.0
        %1192 = vmatprep.subr.mxu0 0.0
        %1193 = vmatpush1.msra.mxu0 0.0
        %1194 = vmatprep.subr.mxu0 0.0
        %1195 = vmatpush1.msra.mxu0 0.0
        %1196 = vmatprep.subr.mxu0 0.0
        %1197 = vmatpush1.msra.mxu0 0.0
        %1198 = vmatprep.subr.mxu0 0.0
        %1199 = vmatpush1.msra.mxu0 0.0
        %1200 = vmatprep.subr.mxu0 0.0
        %1201 = vmatpush1.msra.mxu0 0.0
        %1202 = vmatprep.subr.mxu0 0.0
        %1203 = vmatpush1.msra.mxu0 0.0
        %1204 = vmatprep.subr.mxu0 0.0
        %1205 = vmatpush1.msra.mxu0 0.0
        %1206 = vmatprep.subr.mxu0 0.0
        %1207 = vmatpush1.msra.mxu0 0.0
        %1208 = vmatprep.subr.mxu0 0.0
        %1209 = vmatpush1.msra.mxu0 0.0
        %1210 = vmatprep.subr.mxu0 0.0
        %1211 = vmatpush1.msra.mxu0 0.0
        %1212 = vmatprep.subr.mxu0 0.0
        %1213 = vmatpush1.msra.mxu0 0.0
        %1214 = vmatprep.subr.mxu0 0.0
        %1215 = vmatpush1.msra.mxu0 0.0
        %1216 = vmatprep.subr.mxu0 0.0
        %1217 = vmatpush1.msra.mxu0 0.0
        %1218 = vmatprep.subr.mxu0 0.0
        %1219 = vmatpush1.msra.mxu0 0.0
        %1220 = vmatprep.subr.mxu0 0.0
        %1221 = vmatpush1.msra.mxu0 0.0
        %1222 = vmatprep.subr.mxu0 0.0
        %1223 = vmatpush1.msra.mxu0 0.0
        %1224 = vmatprep.subr.mxu0 0.0
        %1225 = vmatpush1.msra.mxu0 0.0
        %1226 = vmatprep.subr.mxu0 0.0
        %1227 = vmatpush1.msra.mxu0 0.0
        %1228 = vmatprep.subr.mxu0 0.0
        %1229 = vmatpush1.msra.mxu0 0.0
        %1230 = vmatprep.subr.mxu0 0.0
        %1231 = vmatpush1.msra.mxu0 0.0
        %1232 = vmatprep.mubr.f32.mxu0 0.0
        %v1233 = vand.u32 %v314, 4294901760
        %1234 = vmatmul.mubr.f32.gmra.mrb[0].mxu0 %v1233
        %v1235 = vpop.f32.mrb[0].mxu0
        %v1236 = vadd.f32 %v1101, %v1235
        %v1237 = vpop.f32.mrb[0].mxu0
        %1238 = vmatprep.mubr.f32.mxu0 0.0
        %v1239 = vand.u32 %v317, 4294901760
        %1240 = vmatmul.mubr.f32.gmra.mrb[0].mxu0 %v1239
        %v1241 = vpop.f32.mrb[0].mxu0
        %v1242 = vadd.f32 %v1107, %v1241
        %v1243 = vpop.f32.mrb[0].mxu0
        %1244 = vmatprep.mubr.f32.mxu0 0.0
        %v1245 = vand.u32 %v320, 4294901760
        %1246 = vmatmul.mubr.f32.gmra.mrb[0].mxu0 %v1245
        %v1247 = vpop.f32.mrb[0].mxu0
        %v1248 = vadd.f32 %v1113, %v1247
        %v1249 = vpop.f32.mrb[0].mxu0
        %1250 = vmatprep.mubr.f32.mxu0 0.0
        %v1251 = vand.u32 %v323, 4294901760
        %1252 = vmatmul.mubr.f32.gmra.mrb[0].mxu0 %v1251
        %v1253 = vpop.f32.mrb[0].mxu0
        %v1254 = vadd.f32 %v1119, %v1253
        %v1255 = vpop.f32.mrb[0].mxu0
        %1256 = vmatprep.mubr.f32.mxu0 0.0
        %v1257 = vand.u32 %v326, 4294901760
        %1258 = vmatmul.mubr.f32.gmra.mrb[0].mxu0 %v1257
        %v1259 = vpop.f32.mrb[0].mxu0
        %v1260 = vadd.f32 %v1125, %v1259
        %v1261 = vpop.f32.mrb[0].mxu0
        %1262 = vmatprep.mubr.f32.mxu0 0.0
        %v1263 = vand.u32 %v329, 4294901760
        %1264 = vmatmul.mubr.f32.gmra.mrb[0].mxu0 %v1263
        %v1265 = vpop.f32.mrb[0].mxu0
        %v1266 = vadd.f32 %v1131, %v1265
        %v1267 = vpop.f32.mrb[0].mxu0
        %1268 = vmatprep.mubr.f32.mxu0 0.0
        %v1269 = vand.u32 %v332, 4294901760
        %1270 = vmatmul.mubr.f32.gmra.mrb[0].mxu0 %v1269
        %v1271 = vpop.f32.mrb[0].mxu0
        %v1272 = vadd.f32 %v1137, %v1271
        %v1273 = vpop.f32.mrb[0].mxu0
        %1274 = vmatprep.mubr.f32.mxu0 0.0
        %v1275 = vand.u32 %v335, 4294901760
        %1276 = vmatmul.mubr.f32.gmra.mrb[0].mxu0 %v1275
        %v1277 = vpop.f32.mrb[0].mxu0
        %v1278 = vadd.f32 %v1143, %v1277
        %v1279 = vpop.f32.mrb[0].mxu0
        %1280 = vmatprep.mubr.f32.mxu0 0.0
        %v1281 = vand.u32 %v338, 4294901760
        %1282 = vmatmul.mubr.f32.gmra.mrb[0].mxu0 %v1281
        %v1283 = vpop.f32.mrb[0].mxu0
        %v1284 = vadd.f32 %v1149, %v1283
        %v1285 = vpop.f32.mrb[0].mxu0
        %1286 = vmatprep.mubr.f32.mxu0 0.0
        %v1287 = vand.u32 %v341, 4294901760
        %1288 = vmatmul.mubr.f32.gmra.mrb[0].mxu0 %v1287
        %v1289 = vpop.f32.mrb[0].mxu0
        %v1290 = vadd.f32 %v1155, %v1289
        %v1291 = vpop.f32.mrb[0].mxu0
        %1292 = vdwg.mxu0
        %vm1293 = vcmask 523264
        %v1295 = vsel %vm1293, %v1236, 0
        %v1298 = vsel %vm1293, %v1242, 0
        %v1301 = vsel %vm1293, %v1248, 0
        %v1304 = vsel %vm1293, %v1254, 0
        %v1307 = vsel %vm1293, %v1260, 0
        %v1310 = vsel %vm1293, %v1266, 0
        %v1313 = vsel %vm1293, %v1272, 0
        %v1316 = vsel %vm1293, %v1278, 0
        %v1319 = vsel %vm1293, %v1284, 0
        %v1322 = vsel %vm1293, %v1290, 0
        %1324 = vmatprep.subr.mxu0 0.0
        %v1325 = vand.u32 %v298, 4294901760
        %1326 = vmatpush1.msra.mxu0 %v1325
        %1327 = vmatprep.subr.mxu0 0.0
        %v1328 = vand.u32 %v299, 4294901760
        %1329 = vmatpush1.msra.mxu0 %v1328
        %1330 = vmatprep.subr.mxu0 0.0
        %v1331 = vand.u32 %v300, 4294901760
        %1332 = vmatpush1.msra.mxu0 %v1331
        %1333 = vmatprep.subr.mxu0 0.0
        %v1334 = vand.u32 %v301, 4294901760
        %1335 = vmatpush1.msra.mxu0 %v1334
        %1336 = vmatprep.subr.mxu0 0.0
        %v1337 = vand.u32 %v302, 4294901760
        %1338 = vmatpush1.msra.mxu0 %v1337
        %1339 = vmatprep.subr.mxu0 0.0
        %v1340 = vand.u32 %v303, 4294901760
        %1341 = vmatpush1.msra.mxu0 %v1340
        %1342 = vmatprep.subr.mxu0 0.0
        %v1343 = vand.u32 %v304, 4294901760
        %1344 = vmatpush1.msra.mxu0 %v1343
        %1345 = vmatprep.subr.mxu0 0.0
        %v1346 = vand.u32 %v305, 4294901760
        %1347 = vmatpush1.msra.mxu0 %v1346
        %1348 = vmatprep.subr.mxu0 0.0
        %1349 = vmatpush1.msra.mxu0 0.0
        %1350 = vmatprep.subr.mxu0 0.0
        %1351 = vmatpush1.msra.mxu0 0.0
        %1352 = vmatprep.subr.mxu0 0.0
        %1353 = vmatpush1.msra.mxu0 0.0
        %1354 = vmatprep.subr.mxu0 0.0
        %1355 = vmatpush1.msra.mxu0 0.0
        %1356 = vmatprep.subr.mxu0 0.0
        %1357 = vmatpush1.msra.mxu0 0.0
        %1358 = vmatprep.subr.mxu0 0.0
        %1359 = vmatpush1.msra.mxu0 0.0
        %1360 = vmatprep.subr.mxu0 0.0
        %1361 = vmatpush1.msra.mxu0 0.0
        %1362 = vmatprep.subr.mxu0 0.0
        %1363 = vmatpush1.msra.mxu0 0.0
        %1364 = vmatprep.subr.mxu0 0.0
        %1365 = vmatpush1.msra.mxu0 0.0
        %1366 = vmatprep.subr.mxu0 0.0
        %1367 = vmatpush1.msra.mxu0 0.0
        %1368 = vmatprep.subr.mxu0 0.0
        %1369 = vmatpush1.msra.mxu0 0.0
        %1370 = vmatprep.subr.mxu0 0.0
        %1371 = vmatpush1.msra.mxu0 0.0
        %1372 = vmatprep.subr.mxu0 0.0
        %1373 = vmatpush1.msra.mxu0 0.0
        %1374 = vmatprep.subr.mxu0 0.0
        %1375 = vmatpush1.msra.mxu0 0.0
        %1376 = vmatprep.subr.mxu0 0.0
        %1377 = vmatpush1.msra.mxu0 0.0
        %1378 = vmatprep.subr.mxu0 0.0
        %1379 = vmatpush1.msra.mxu0 0.0
        %1380 = vmatprep.subr.mxu0 0.0
        %1381 = vmatpush1.msra.mxu0 0.0
        %1382 = vmatprep.subr.mxu0 0.0
        %1383 = vmatpush1.msra.mxu0 0.0
        %1384 = vmatprep.subr.mxu0 0.0
        %1385 = vmatpush1.msra.mxu0 0.0
        %1386 = vmatprep.subr.mxu0 0.0
        %1387 = vmatpush1.msra.mxu0 0.0
        %1388 = vmatprep.subr.mxu0 0.0
        %1389 = vmatpush1.msra.mxu0 0.0
        %1390 = vmatprep.subr.mxu0 0.0
        %1391 = vmatpush1.msra.mxu0 0.0
        %1392 = vmatprep.subr.mxu0 0.0
        %1393 = vmatpush1.msra.mxu0 0.0
        %1394 = vmatprep.subr.mxu0 0.0
        %1395 = vmatpush1.msra.mxu0 0.0
        %1396 = vmatprep.mubr.f32.mxu0 0.0
        %v1397 = vand.u32 %v1295, 4294901760
        %v1398 = vsub.f32 %v1295, %v1397
        %v1399 = vand.u32 %v1398, 4294901760
        %v1400 = vsub.f32 %v1398, %v1399
        %v1401 = vand.u32 %v1400, 4294901760
        %1402 = vmatmul.mubr.f32.gmra.mrb[0].mxu0 %v1401
        %v1403 = vpop.f32.mrb[0].mxu0
        %v1404 = vadd.f32 0.0, %v1403
        %v1405 = vpop.f32.mrb[0].mxu0
        %1406 = vmatprep.mubr.f32.mxu0 0.0
        %v1407 = vand.u32 %v1298, 4294901760
        %v1408 = vsub.f32 %v1298, %v1407
        %v1409 = vand.u32 %v1408, 4294901760
        %v1410 = vsub.f32 %v1408, %v1409
        %v1411 = vand.u32 %v1410, 4294901760
        %1412 = vmatmul.mubr.f32.gmra.mrb[0].mxu0 %v1411
        %v1413 = vpop.f32.mrb[0].mxu0
        %v1414 = vadd.f32 0.0, %v1413
        %v1415 = vpop.f32.mrb[0].mxu0
        %1416 = vmatprep.mubr.f32.mxu0 0.0
        %v1417 = vand.u32 %v1301, 4294901760
        %v1418 = vsub.f32 %v1301, %v1417
        %v1419 = vand.u32 %v1418, 4294901760
        %v1420 = vsub.f32 %v1418, %v1419
        %v1421 = vand.u32 %v1420, 4294901760
        %1422 = vmatmul.mubr.f32.gmra.mrb[0].mxu0 %v1421
        %v1423 = vpop.f32.mrb[0].mxu0
        %v1424 = vadd.f32 0.0, %v1423
        %v1425 = vpop.f32.mrb[0].mxu0
        %1426 = vmatprep.mubr.f32.mxu0 0.0
        %v1427 = vand.u32 %v1304, 4294901760
        %v1428 = vsub.f32 %v1304, %v1427
        %v1429 = vand.u32 %v1428, 4294901760
        %v1430 = vsub.f32 %v1428, %v1429
        %v1431 = vand.u32 %v1430, 4294901760
        %1432 = vmatmul.mubr.f32.gmra.mrb[0].mxu0 %v1431
        %v1433 = vpop.f32.mrb[0].mxu0
        %v1434 = vadd.f32 0.0, %v1433
        %v1435 = vpop.f32.mrb[0].mxu0
        %1436 = vmatprep.mubr.f32.mxu0 0.0
        %v1437 = vand.u32 %v1307, 4294901760
        %v1438 = vsub.f32 %v1307, %v1437
        %v1439 = vand.u32 %v1438, 4294901760
        %v1440 = vsub.f32 %v1438, %v1439
        %v1441 = vand.u32 %v1440, 4294901760
        %1442 = vmatmul.mubr.f32.gmra.mrb[0].mxu0 %v1441
        %v1443 = vpop.f32.mrb[0].mxu0
        %v1444 = vadd.f32 0.0, %v1443
        %v1445 = vpop.f32.mrb[0].mxu0
        %1446 = vmatprep.mubr.f32.mxu0 0.0
        %v1447 = vand.u32 %v1310, 4294901760
        %v1448 = vsub.f32 %v1310, %v1447
        %v1449 = vand.u32 %v1448, 4294901760
        %v1450 = vsub.f32 %v1448, %v1449
        %v1451 = vand.u32 %v1450, 4294901760
        %1452 = vmatmul.mubr.f32.gmra.mrb[0].mxu0 %v1451
        %v1453 = vpop.f32.mrb[0].mxu0
        %v1454 = vadd.f32 0.0, %v1453
        %v1455 = vpop.f32.mrb[0].mxu0
        %1456 = vmatprep.mubr.f32.mxu0 0.0
        %v1457 = vand.u32 %v1313, 4294901760
        %v1458 = vsub.f32 %v1313, %v1457
        %v1459 = vand.u32 %v1458, 4294901760
        %v1460 = vsub.f32 %v1458, %v1459
        %v1461 = vand.u32 %v1460, 4294901760
        %1462 = vmatmul.mubr.f32.gmra.mrb[0].mxu0 %v1461
        %v1463 = vpop.f32.mrb[0].mxu0
        %v1464 = vadd.f32 0.0, %v1463
        %v1465 = vpop.f32.mrb[0].mxu0
        %1466 = vmatprep.mubr.f32.mxu0 0.0
        %v1467 = vand.u32 %v1316, 4294901760
        %v1468 = vsub.f32 %v1316, %v1467
        %v1469 = vand.u32 %v1468, 4294901760
        %v1470 = vsub.f32 %v1468, %v1469
        %v1471 = vand.u32 %v1470, 4294901760
        %1472 = vmatmul.mubr.f32.gmra.mrb[0].mxu0 %v1471
        %v1473 = vpop.f32.mrb[0].mxu0
        %v1474 = vadd.f32 0.0, %v1473
        %v1475 = vpop.f32.mrb[0].mxu0
        %1476 = vmatprep.mubr.f32.mxu0 0.0
        %v1477 = vand.u32 %v1319, 4294901760
        %v1478 = vsub.f32 %v1319, %v1477
        %v1479 = vand.u32 %v1478, 4294901760
        %v1480 = vsub.f32 %v1478, %v1479
        %v1481 = vand.u32 %v1480, 4294901760
        %1482 = vmatmul.mubr.f32.gmra.mrb[0].mxu0 %v1481
        %v1483 = vpop.f32.mrb[0].mxu0
        %v1484 = vadd.f32 0.0, %v1483
        %v1485 = vpop.f32.mrb[0].mxu0
        %1486 = vmatprep.mubr.f32.mxu0 0.0
        %v1487 = vand.u32 %v1322, 4294901760
        %v1488 = vsub.f32 %v1322, %v1487
        %v1489 = vand.u32 %v1488, 4294901760
        %v1490 = vsub.f32 %v1488, %v1489
        %v1491 = vand.u32 %v1490, 4294901760
        %1492 = vmatmul.mubr.f32.gmra.mrb[0].mxu0 %v1491
        %v1493 = vpop.f32.mrb[0].mxu0
        %v1494 = vadd.f32 0.0, %v1493
        %v1495 = vpop.f32.mrb[0].mxu0
        %1496 = vdwg.mxu0
        %1497 = vmatprep.subr.mxu0 0.0
        %v1498 = vand.u32 %v298, 4294901760
        %v1499 = vsub.f32 %v298, %v1498
        %v1500 = vand.u32 %v1499, 4294901760
        %v1501 = vsub.f32 %v1499, %v1500
        %v1502 = vand.u32 %v1501, 4294901760
        %1503 = vmatpush1.msra.mxu0 %v1502
        %1504 = vmatprep.subr.mxu0 0.0
        %v1505 = vand.u32 %v299, 4294901760
        %v1506 = vsub.f32 %v299, %v1505
        %v1507 = vand.u32 %v1506, 4294901760
        %v1508 = vsub.f32 %v1506, %v1507
        %v1509 = vand.u32 %v1508, 4294901760
        %1510 = vmatpush1.msra.mxu0 %v1509
        %1511 = vmatprep.subr.mxu0 0.0
        %v1512 = vand.u32 %v300, 4294901760
        %v1513 = vsub.f32 %v300, %v1512
        %v1514 = vand.u32 %v1513, 4294901760
        %v1515 = vsub.f32 %v1513, %v1514
        %v1516 = vand.u32 %v1515, 4294901760
        %1517 = vmatpush1.msra.mxu0 %v1516
        %1518 = vmatprep.subr.mxu0 0.0
        %v1519 = vand.u32 %v301, 4294901760
        %v1520 = vsub.f32 %v301, %v1519
        %v1521 = vand.u32 %v1520, 4294901760
        %v1522 = vsub.f32 %v1520, %v1521
        %v1523 = vand.u32 %v1522, 4294901760
        %1524 = vmatpush1.msra.mxu0 %v1523
        %1525 = vmatprep.subr.mxu0 0.0
        %v1526 = vand.u32 %v302, 4294901760
        %v1527 = vsub.f32 %v302, %v1526
        %v1528 = vand.u32 %v1527, 4294901760
        %v1529 = vsub.f32 %v1527, %v1528
        %v1530 = vand.u32 %v1529, 4294901760
        %1531 = vmatpush1.msra.mxu0 %v1530
        %1532 = vmatprep.subr.mxu0 0.0
        %v1533 = vand.u32 %v303, 4294901760
        %v1534 = vsub.f32 %v303, %v1533
        %v1535 = vand.u32 %v1534, 4294901760
        %v1536 = vsub.f32 %v1534, %v1535
        %v1537 = vand.u32 %v1536, 4294901760
        %1538 = vmatpush1.msra.mxu0 %v1537
        %1539 = vmatprep.subr.mxu0 0.0
        %v1540 = vand.u32 %v304, 4294901760
        %v1541 = vsub.f32 %v304, %v1540
        %v1542 = vand.u32 %v1541, 4294901760
        %v1543 = vsub.f32 %v1541, %v1542
        %v1544 = vand.u32 %v1543, 4294901760
        %1545 = vmatpush1.msra.mxu0 %v1544
        %1546 = vmatprep.subr.mxu0 0.0
        %v1547 = vand.u32 %v305, 4294901760
        %v1548 = vsub.f32 %v305, %v1547
        %v1549 = vand.u32 %v1548, 4294901760
        %v1550 = vsub.f32 %v1548, %v1549
        %v1551 = vand.u32 %v1550, 4294901760
        %1552 = vmatpush1.msra.mxu0 %v1551
        %1553 = vmatprep.subr.mxu0 0.0
        %1554 = vmatpush1.msra.mxu0 0.0
        %1555 = vmatprep.subr.mxu0 0.0
        %1556 = vmatpush1.msra.mxu0 0.0
        %1557 = vmatprep.subr.mxu0 0.0
        %1558 = vmatpush1.msra.mxu0 0.0
        %1559 = vmatprep.subr.mxu0 0.0
        %1560 = vmatpush1.msra.mxu0 0.0
        %1561 = vmatprep.subr.mxu0 0.0
        %1562 = vmatpush1.msra.mxu0 0.0
        %1563 = vmatprep.subr.mxu0 0.0
        %1564 = vmatpush1.msra.mxu0 0.0
        %1565 = vmatprep.subr.mxu0 0.0
        %1566 = vmatpush1.msra.mxu0 0.0
        %1567 = vmatprep.subr.mxu0 0.0
        %1568 = vmatpush1.msra.mxu0 0.0
        %1569 = vmatprep.subr.mxu0 0.0
        %1570 = vmatpush1.msra.mxu0 0.0
        %1571 = vmatprep.subr.mxu0 0.0
        %1572 = vmatpush1.msra.mxu0 0.0
        %1573 = vmatprep.subr.mxu0 0.0
        %1574 = vmatpush1.msra.mxu0 0.0
        %1575 = vmatprep.subr.mxu0 0.0
        %1576 = vmatpush1.msra.mxu0 0.0
        %1577 = vmatprep.subr.mxu0 0.0
        %1578 = vmatpush1.msra.mxu0 0.0
        %1579 = vmatprep.subr.mxu0 0.0
        %1580 = vmatpush1.msra.mxu0 0.0
        %1581 = vmatprep.subr.mxu0 0.0
        %1582 = vmatpush1.msra.mxu0 0.0
        %1583 = vmatprep.subr.mxu0 0.0
        %1584 = vmatpush1.msra.mxu0 0.0
        %1585 = vmatprep.subr.mxu0 0.0
        %1586 = vmatpush1.msra.mxu0 0.0
        %1587 = vmatprep.subr.mxu0 0.0
        %1588 = vmatpush1.msra.mxu0 0.0
        %1589 = vmatprep.subr.mxu0 0.0
        %1590 = vmatpush1.msra.mxu0 0.0
        %1591 = vmatprep.subr.mxu0 0.0
        %1592 = vmatpush1.msra.mxu0 0.0
        %1593 = vmatprep.subr.mxu0 0.0
        %1594 = vmatpush1.msra.mxu0 0.0
        %1595 = vmatprep.subr.mxu0 0.0
        %1596 = vmatpush1.msra.mxu0 0.0
        %1597 = vmatprep.subr.mxu0 0.0
        %1598 = vmatpush1.msra.mxu0 0.0
        %1599 = vmatprep.subr.mxu0 0.0
        %1600 = vmatpush1.msra.mxu0 0.0
        %1601 = vmatprep.mubr.f32.mxu0 0.0
        %v1602 = vand.u32 %v1295, 4294901760
        %1603 = vmatmul.mubr.f32.gmra.mrb[0].mxu0 %v1602
        %v1604 = vpop.f32.mrb[0].mxu0
        %v1605 = vadd.f32 %v1404, %v1604
        %v1606 = vpop.f32.mrb[0].mxu0
        %1607 = vmatprep.mubr.f32.mxu0 0.0
        %v1608 = vand.u32 %v1298, 4294901760
        %1609 = vmatmul.mubr.f32.gmra.mrb[0].mxu0 %v1608
        %v1610 = vpop.f32.mrb[0].mxu0
        %v1611 = vadd.f32 %v1414, %v1610
        %v1612 = vpop.f32.mrb[0].mxu0
        %1613 = vmatprep.mubr.f32.mxu0 0.0
        %v1614 = vand.u32 %v1301, 4294901760
        %1615 = vmatmul.mubr.f32.gmra.mrb[0].mxu0 %v1614
        %v1616 = vpop.f32.mrb[0].mxu0
        %v1617 = vadd.f32 %v1424, %v1616
        %v1618 = vpop.f32.mrb[0].mxu0
        %1619 = vmatprep.mubr.f32.mxu0 0.0
        %v1620 = vand.u32 %v1304, 4294901760
        %1621 = vmatmul.mubr.f32.gmra.mrb[0].mxu0 %v1620
        %v1622 = vpop.f32.mrb[0].mxu0
        %v1623 = vadd.f32 %v1434, %v1622
        %v1624 = vpop.f32.mrb[0].mxu0
        %1625 = vmatprep.mubr.f32.mxu0 0.0
        %v1626 = vand.u32 %v1307, 4294901760
        %1627 = vmatmul.mubr.f32.gmra.mrb[0].mxu0 %v1626
        %v1628 = vpop.f32.mrb[0].mxu0
        %v1629 = vadd.f32 %v1444, %v1628
        %v1630 = vpop.f32.mrb[0].mxu0
        %1631 = vmatprep.mubr.f32.mxu0 0.0
        %v1632 = vand.u32 %v1310, 4294901760
        %1633 = vmatmul.mubr.f32.gmra.mrb[0].mxu0 %v1632
        %v1634 = vpop.f32.mrb[0].mxu0
        %v1635 = vadd.f32 %v1454, %v1634
        %v1636 = vpop.f32.mrb[0].mxu0
        %1637 = vmatprep.mubr.f32.mxu0 0.0
        %v1638 = vand.u32 %v1313, 4294901760
        %1639 = vmatmul.mubr.f32.gmra.mrb[0].mxu0 %v1638
        %v1640 = vpop.f32.mrb[0].mxu0
        %v1641 = vadd.f32 %v1464, %v1640
        %v1642 = vpop.f32.mrb[0].mxu0
        %1643 = vmatprep.mubr.f32.mxu0 0.0
        %v1644 = vand.u32 %v1316, 4294901760
        %1645 = vmatmul.mubr.f32.gmra.mrb[0].mxu0 %v1644
        %v1646 = vpop.f32.mrb[0].mxu0
        %v1647 = vadd.f32 %v1474, %v1646
        %v1648 = vpop.f32.mrb[0].mxu0
        %1649 = vmatprep.mubr.f32.mxu0 0.0
        %v1650 = vand.u32 %v1319, 4294901760
        %1651 = vmatmul.mubr.f32.gmra.mrb[0].mxu0 %v1650
        %v1652 = vpop.f32.mrb[0].mxu0
        %v1653 = vadd.f32 %v1484, %v1652
        %v1654 = vpop.f32.mrb[0].mxu0
        %1655 = vmatprep.mubr.f32.mxu0 0.0
        %v1656 = vand.u32 %v1322, 4294901760
        %1657 = vmatmul.mubr.f32.gmra.mrb[0].mxu0 %v1656
        %v1658 = vpop.f32.mrb[0].mxu0
        %v1659 = vadd.f32 %v1494, %v1658
        %v1660 = vpop.f32.mrb[0].mxu0
        %1661 = vdwg.mxu0
        %1662 = vmatprep.subr.mxu0 0.0
        %v1663 = vand.u32 %v298, 4294901760
        %v1664 = vsub.f32 %v298, %v1663
        %1665 = vmatpush1.msra.mxu0 %v1664
        %1666 = vmatprep.subr.mxu0 0.0
        %v1667 = vand.u32 %v299, 4294901760
        %v1668 = vsub.f32 %v299, %v1667
        %1669 = vmatpush1.msra.mxu0 %v1668
        %1670 = vmatprep.subr.mxu0 0.0
        %v1671 = vand.u32 %v300, 4294901760
        %v1672 = vsub.f32 %v300, %v1671
        %1673 = vmatpush1.msra.mxu0 %v1672
        %1674 = vmatprep.subr.mxu0 0.0
        %v1675 = vand.u32 %v301, 4294901760
        %v1676 = vsub.f32 %v301, %v1675
        %1677 = vmatpush1.msra.mxu0 %v1676
        %1678 = vmatprep.subr.mxu0 0.0
        %v1679 = vand.u32 %v302, 4294901760
        %v1680 = vsub.f32 %v302, %v1679
        %1681 = vmatpush1.msra.mxu0 %v1680
        %1682 = vmatprep.subr.mxu0 0.0
        %v1683 = vand.u32 %v303, 4294901760
        %v1684 = vsub.f32 %v303, %v1683
        %1685 = vmatpush1.msra.mxu0 %v1684
        %1686 = vmatprep.subr.mxu0 0.0
        %v1687 = vand.u32 %v304, 4294901760
        %v1688 = vsub.f32 %v304, %v1687
        %1689 = vmatpush1.msra.mxu0 %v1688
        %1690 = vmatprep.subr.mxu0 0.0
        %v1691 = vand.u32 %v305, 4294901760
        %v1692 = vsub.f32 %v305, %v1691
        %1693 = vmatpush1.msra.mxu0 %v1692
        %1694 = vmatprep.subr.mxu0 0.0
        %1695 = vmatpush1.msra.mxu0 0.0
        %1696 = vmatprep.subr.mxu0 0.0
        %1697 = vmatpush1.msra.mxu0 0.0
        %1698 = vmatprep.subr.mxu0 0.0
        %1699 = vmatpush1.msra.mxu0 0.0
        %1700 = vmatprep.subr.mxu0 0.0
        %1701 = vmatpush1.msra.mxu0 0.0
        %1702 = vmatprep.subr.mxu0 0.0
        %1703 = vmatpush1.msra.mxu0 0.0
        %1704 = vmatprep.subr.mxu0 0.0
        %1705 = vmatpush1.msra.mxu0 0.0
        %1706 = vmatprep.subr.mxu0 0.0
        %1707 = vmatpush1.msra.mxu0 0.0
        %1708 = vmatprep.subr.mxu0 0.0
        %1709 = vmatpush1.msra.mxu0 0.0
        %1710 = vmatprep.subr.mxu0 0.0
        %1711 = vmatpush1.msra.mxu0 0.0
        %1712 = vmatprep.subr.mxu0 0.0
        %1713 = vmatpush1.msra.mxu0 0.0
        %1714 = vmatprep.subr.mxu0 0.0
        %1715 = vmatpush1.msra.mxu0 0.0
        %1716 = vmatprep.subr.mxu0 0.0
        %1717 = vmatpush1.msra.mxu0 0.0
        %1718 = vmatprep.subr.mxu0 0.0
        %1719 = vmatpush1.msra.mxu0 0.0
        %1720 = vmatprep.subr.mxu0 0.0
        %1721 = vmatpush1.msra.mxu0 0.0
        %1722 = vmatprep.subr.mxu0 0.0
        %1723 = vmatpush1.msra.mxu0 0.0
        %1724 = vmatprep.subr.mxu0 0.0
        %1725 = vmatpush1.msra.mxu0 0.0
        %1726 = vmatprep.subr.mxu0 0.0
        %1727 = vmatpush1.msra.mxu0 0.0
        %1728 = vmatprep.subr.mxu0 0.0
        %1729 = vmatpush1.msra.mxu0 0.0
        %1730 = vmatprep.subr.mxu0 0.0
        %1731 = vmatpush1.msra.mxu0 0.0
        %1732 = vmatprep.subr.mxu0 0.0
        %1733 = vmatpush1.msra.mxu0 0.0
        %1734 = vmatprep.subr.mxu0 0.0
        %1735 = vmatpush1.msra.mxu0 0.0
        %1736 = vmatprep.subr.mxu0 0.0
        %1737 = vmatpush1.msra.mxu0 0.0
        %1738 = vmatprep.subr.mxu0 0.0
        %1739 = vmatpush1.msra.mxu0 0.0
        %1740 = vmatprep.subr.mxu0 0.0
        %1741 = vmatpush1.msra.mxu0 0.0
        %1742 = vmatprep.mubr.f32.mxu0 0.0
        %v1743 = vand.u32 %v1295, 4294901760
        %v1744 = vsub.f32 %v1295, %v1743
        %1745 = vmatmul.mubr.f32.gmra.mrb[0].mxu0 %v1744
        %v1746 = vpop.f32.mrb[0].mxu0
        %v1747 = vadd.f32 %v1605, %v1746
        %v1748 = vpop.f32.mrb[0].mxu0
        %1749 = vmatprep.mubr.f32.mxu0 0.0
        %v1750 = vand.u32 %v1298, 4294901760
        %v1751 = vsub.f32 %v1298, %v1750
        %1752 = vmatmul.mubr.f32.gmra.mrb[0].mxu0 %v1751
        %v1753 = vpop.f32.mrb[0].mxu0
        %v1754 = vadd.f32 %v1611, %v1753
        %v1755 = vpop.f32.mrb[0].mxu0
        %1756 = vmatprep.mubr.f32.mxu0 0.0
        %v1757 = vand.u32 %v1301, 4294901760
        %v1758 = vsub.f32 %v1301, %v1757
        %1759 = vmatmul.mubr.f32.gmra.mrb[0].mxu0 %v1758
        %v1760 = vpop.f32.mrb[0].mxu0
        %v1761 = vadd.f32 %v1617, %v1760
        %v1762 = vpop.f32.mrb[0].mxu0
        %1763 = vmatprep.mubr.f32.mxu0 0.0
        %v1764 = vand.u32 %v1304, 4294901760
        %v1765 = vsub.f32 %v1304, %v1764
        %1766 = vmatmul.mubr.f32.gmra.mrb[0].mxu0 %v1765
        %v1767 = vpop.f32.mrb[0].mxu0
        %v1768 = vadd.f32 %v1623, %v1767
        %v1769 = vpop.f32.mrb[0].mxu0
        %1770 = vmatprep.mubr.f32.mxu0 0.0
        %v1771 = vand.u32 %v1307, 4294901760
        %v1772 = vsub.f32 %v1307, %v1771
        %1773 = vmatmul.mubr.f32.gmra.mrb[0].mxu0 %v1772
        %v1774 = vpop.f32.mrb[0].mxu0
        %v1775 = vadd.f32 %v1629, %v1774
        %v1776 = vpop.f32.mrb[0].mxu0
        %1777 = vmatprep.mubr.f32.mxu0 0.0
        %v1778 = vand.u32 %v1310, 4294901760
        %v1779 = vsub.f32 %v1310, %v1778
        %1780 = vmatmul.mubr.f32.gmra.mrb[0].mxu0 %v1779
        %v1781 = vpop.f32.mrb[0].mxu0
        %v1782 = vadd.f32 %v1635, %v1781
        %v1783 = vpop.f32.mrb[0].mxu0
        %1784 = vmatprep.mubr.f32.mxu0 0.0
        %v1785 = vand.u32 %v1313, 4294901760
        %v1786 = vsub.f32 %v1313, %v1785
        %1787 = vmatmul.mubr.f32.gmra.mrb[0].mxu0 %v1786
        %v1788 = vpop.f32.mrb[0].mxu0
        %v1789 = vadd.f32 %v1641, %v1788
        %v1790 = vpop.f32.mrb[0].mxu0
        %1791 = vmatprep.mubr.f32.mxu0 0.0
        %v1792 = vand.u32 %v1316, 4294901760
        %v1793 = vsub.f32 %v1316, %v1792
        %1794 = vmatmul.mubr.f32.gmra.mrb[0].mxu0 %v1793
        %v1795 = vpop.f32.mrb[0].mxu0
        %v1796 = vadd.f32 %v1647, %v1795
        %v1797 = vpop.f32.mrb[0].mxu0
        %1798 = vmatprep.mubr.f32.mxu0 0.0
        %v1799 = vand.u32 %v1319, 4294901760
        %v1800 = vsub.f32 %v1319, %v1799
        %1801 = vmatmul.mubr.f32.gmra.mrb[0].mxu0 %v1800
        %v1802 = vpop.f32.mrb[0].mxu0
        %v1803 = vadd.f32 %v1653, %v1802
        %v1804 = vpop.f32.mrb[0].mxu0
        %1805 = vmatprep.mubr.f32.mxu0 0.0
        %v1806 = vand.u32 %v1322, 4294901760
        %v1807 = vsub.f32 %v1322, %v1806
        %1808 = vmatmul.mubr.f32.gmra.mrb[0].mxu0 %v1807
        %v1809 = vpop.f32.mrb[0].mxu0
        %v1810 = vadd.f32 %v1659, %v1809
        %v1811 = vpop.f32.mrb[0].mxu0
        %1812 = vdwg.mxu0
        %1813 = vmatprep.subr.mxu0 0.0
        %v1814 = vand.u32 %v298, 4294901760
        %1815 = vmatpush1.msra.mxu0 %v1814
        %1816 = vmatprep.subr.mxu0 0.0
        %v1817 = vand.u32 %v299, 4294901760
        %1818 = vmatpush1.msra.mxu0 %v1817
        %1819 = vmatprep.subr.mxu0 0.0
        %v1820 = vand.u32 %v300, 4294901760
        %1821 = vmatpush1.msra.mxu0 %v1820
        %1822 = vmatprep.subr.mxu0 0.0
        %v1823 = vand.u32 %v301, 4294901760
        %1824 = vmatpush1.msra.mxu0 %v1823
        %1825 = vmatprep.subr.mxu0 0.0
        %v1826 = vand.u32 %v302, 4294901760
        %1827 = vmatpush1.msra.mxu0 %v1826
        %1828 = vmatprep.subr.mxu0 0.0
        %v1829 = vand.u32 %v303, 4294901760
        %1830 = vmatpush1.msra.mxu0 %v1829
        %1831 = vmatprep.subr.mxu0 0.0
        %v1832 = vand.u32 %v304, 4294901760
        %1833 = vmatpush1.msra.mxu0 %v1832
        %1834 = vmatprep.subr.mxu0 0.0
        %v1835 = vand.u32 %v305, 4294901760
        %1836 = vmatpush1.msra.mxu0 %v1835
        %1837 = vmatprep.subr.mxu0 0.0
        %1838 = vmatpush1.msra.mxu0 0.0
        %1839 = vmatprep.subr.mxu0 0.0
        %1840 = vmatpush1.msra.mxu0 0.0
        %1841 = vmatprep.subr.mxu0 0.0
        %1842 = vmatpush1.msra.mxu0 0.0
        %1843 = vmatprep.subr.mxu0 0.0
        %1844 = vmatpush1.msra.mxu0 0.0
        %1845 = vmatprep.subr.mxu0 0.0
        %1846 = vmatpush1.msra.mxu0 0.0
        %1847 = vmatprep.subr.mxu0 0.0
        %1848 = vmatpush1.msra.mxu0 0.0
        %1849 = vmatprep.subr.mxu0 0.0
        %1850 = vmatpush1.msra.mxu0 0.0
        %1851 = vmatprep.subr.mxu0 0.0
        %1852 = vmatpush1.msra.mxu0 0.0
        %1853 = vmatprep.subr.mxu0 0.0
        %1854 = vmatpush1.msra.mxu0 0.0
        %1855 = vmatprep.subr.mxu0 0.0
        %1856 = vmatpush1.msra.mxu0 0.0
        %1857 = vmatprep.subr.mxu0 0.0
        %1858 = vmatpush1.msra.mxu0 0.0
        %1859 = vmatprep.subr.mxu0 0.0
        %1860 = vmatpush1.msra.mxu0 0.0
        %1861 = vmatprep.subr.mxu0 0.0
        %1862 = vmatpush1.msra.mxu0 0.0
        %1863 = vmatprep.subr.mxu0 0.0
        %1864 = vmatpush1.msra.mxu0 0.0
        %1865 = vmatprep.subr.mxu0 0.0
        %1866 = vmatpush1.msra.mxu0 0.0
        %1867 = vmatprep.subr.mxu0 0.0
        %1868 = vmatpush1.msra.mxu0 0.0
        %1869 = vmatprep.subr.mxu0 0.0
        %1870 = vmatpush1.msra.mxu0 0.0
        %1871 = vmatprep.subr.mxu0 0.0
        %1872 = vmatpush1.msra.mxu0 0.0
        %1873 = vmatprep.subr.mxu0 0.0
        %1874 = vmatpush1.msra.mxu0 0.0
        %1875 = vmatprep.subr.mxu0 0.0
        %1876 = vmatpush1.msra.mxu0 0.0
        %1877 = vmatprep.subr.mxu0 0.0
        %1878 = vmatpush1.msra.mxu0 0.0
        %1879 = vmatprep.subr.mxu0 0.0
        %1880 = vmatpush1.msra.mxu0 0.0
        %1881 = vmatprep.subr.mxu0 0.0
        %1882 = vmatpush1.msra.mxu0 0.0
        %1883 = vmatprep.subr.mxu0 0.0
        %1884 = vmatpush1.msra.mxu0 0.0
        %1885 = vmatprep.mubr.f32.mxu0 0.0
        %v1886 = vand.u32 %v1295, 4294901760
        %v1887 = vsub.f32 %v1295, %v1886
        %v1888 = vand.u32 %v1887, 4294901760
        %1889 = vmatmul.mubr.f32.gmra.mrb[0].mxu0 %v1888
        %v1890 = vpop.f32.mrb[0].mxu0
        %v1891 = vadd.f32 %v1747, %v1890
        %v1892 = vpop.f32.mrb[0].mxu0
        %1893 = vmatprep.mubr.f32.mxu0 0.0
        %v1894 = vand.u32 %v1298, 4294901760
        %v1895 = vsub.f32 %v1298, %v1894
        %v1896 = vand.u32 %v1895, 4294901760
        %1897 = vmatmul.mubr.f32.gmra.mrb[0].mxu0 %v1896
        %v1898 = vpop.f32.mrb[0].mxu0
        %v1899 = vadd.f32 %v1754, %v1898
        %v1900 = vpop.f32.mrb[0].mxu0
        %1901 = vmatprep.mubr.f32.mxu0 0.0
        %v1902 = vand.u32 %v1301, 4294901760
        %v1903 = vsub.f32 %v1301, %v1902
        %v1904 = vand.u32 %v1903, 4294901760
        %1905 = vmatmul.mubr.f32.gmra.mrb[0].mxu0 %v1904
        %v1906 = vpop.f32.mrb[0].mxu0
        %v1907 = vadd.f32 %v1761, %v1906
        %v1908 = vpop.f32.mrb[0].mxu0
        %1909 = vmatprep.mubr.f32.mxu0 0.0
        %v1910 = vand.u32 %v1304, 4294901760
        %v1911 = vsub.f32 %v1304, %v1910
        %v1912 = vand.u32 %v1911, 4294901760
        %1913 = vmatmul.mubr.f32.gmra.mrb[0].mxu0 %v1912
        %v1914 = vpop.f32.mrb[0].mxu0
        %v1915 = vadd.f32 %v1768, %v1914
        %v1916 = vpop.f32.mrb[0].mxu0
        %1917 = vmatprep.mubr.f32.mxu0 0.0
        %v1918 = vand.u32 %v1307, 4294901760
        %v1919 = vsub.f32 %v1307, %v1918
        %v1920 = vand.u32 %v1919, 4294901760
        %1921 = vmatmul.mubr.f32.gmra.mrb[0].mxu0 %v1920
        %v1922 = vpop.f32.mrb[0].mxu0
        %v1923 = vadd.f32 %v1775, %v1922
        %v1924 = vpop.f32.mrb[0].mxu0
        %1925 = vmatprep.mubr.f32.mxu0 0.0
        %v1926 = vand.u32 %v1310, 4294901760
        %v1927 = vsub.f32 %v1310, %v1926
        %v1928 = vand.u32 %v1927, 4294901760
        %1929 = vmatmul.mubr.f32.gmra.mrb[0].mxu0 %v1928
        %v1930 = vpop.f32.mrb[0].mxu0
        %v1931 = vadd.f32 %v1782, %v1930
        %v1932 = vpop.f32.mrb[0].mxu0
        %1933 = vmatprep.mubr.f32.mxu0 0.0
        %v1934 = vand.u32 %v1313, 4294901760
        %v1935 = vsub.f32 %v1313, %v1934
        %v1936 = vand.u32 %v1935, 4294901760
        %1937 = vmatmul.mubr.f32.gmra.mrb[0].mxu0 %v1936
        %v1938 = vpop.f32.mrb[0].mxu0
        %v1939 = vadd.f32 %v1789, %v1938
        %v1940 = vpop.f32.mrb[0].mxu0
        %1941 = vmatprep.mubr.f32.mxu0 0.0
        %v1942 = vand.u32 %v1316, 4294901760
        %v1943 = vsub.f32 %v1316, %v1942
        %v1944 = vand.u32 %v1943, 4294901760
        %1945 = vmatmul.mubr.f32.gmra.mrb[0].mxu0 %v1944
        %v1946 = vpop.f32.mrb[0].mxu0
        %v1947 = vadd.f32 %v1796, %v1946
        %v1948 = vpop.f32.mrb[0].mxu0
        %1949 = vmatprep.mubr.f32.mxu0 0.0
        %v1950 = vand.u32 %v1319, 4294901760
        %v1951 = vsub.f32 %v1319, %v1950
        %v1952 = vand.u32 %v1951, 4294901760
        %1953 = vmatmul.mubr.f32.gmra.mrb[0].mxu0 %v1952
        %v1954 = vpop.f32.mrb[0].mxu0
        %v1955 = vadd.f32 %v1803, %v1954
        %v1956 = vpop.f32.mrb[0].mxu0
        %1957 = vmatprep.mubr.f32.mxu0 0.0
        %v1958 = vand.u32 %v1322, 4294901760
        %v1959 = vsub.f32 %v1322, %v1958
        %v1960 = vand.u32 %v1959, 4294901760
        %1961 = vmatmul.mubr.f32.gmra.mrb[0].mxu0 %v1960
        %v1962 = vpop.f32.mrb[0].mxu0
        %v1963 = vadd.f32 %v1810, %v1962
        %v1964 = vpop.f32.mrb[0].mxu0
        %1965 = vdwg.mxu0
        %1966 = vmatprep.subr.mxu0 0.0
        %v1967 = vand.u32 %v298, 4294901760
        %v1968 = vsub.f32 %v298, %v1967
        %v1969 = vand.u32 %v1968, 4294901760
        %1970 = vmatpush1.msra.mxu0 %v1969
        %1971 = vmatprep.subr.mxu0 0.0
        %v1972 = vand.u32 %v299, 4294901760
        %v1973 = vsub.f32 %v299, %v1972
        %v1974 = vand.u32 %v1973, 4294901760
        %1975 = vmatpush1.msra.mxu0 %v1974
        %1976 = vmatprep.subr.mxu0 0.0
        %v1977 = vand.u32 %v300, 4294901760
        %v1978 = vsub.f32 %v300, %v1977
        %v1979 = vand.u32 %v1978, 4294901760
        %1980 = vmatpush1.msra.mxu0 %v1979
        %1981 = vmatprep.subr.mxu0 0.0
        %v1982 = vand.u32 %v301, 4294901760
        %v1983 = vsub.f32 %v301, %v1982
        %v1984 = vand.u32 %v1983, 4294901760
        %1985 = vmatpush1.msra.mxu0 %v1984
        %1986 = vmatprep.subr.mxu0 0.0
        %v1987 = vand.u32 %v302, 4294901760
        %v1988 = vsub.f32 %v302, %v1987
        %v1989 = vand.u32 %v1988, 4294901760
        %1990 = vmatpush1.msra.mxu0 %v1989
        %1991 = vmatprep.subr.mxu0 0.0
        %v1992 = vand.u32 %v303, 4294901760
        %v1993 = vsub.f32 %v303, %v1992
        %v1994 = vand.u32 %v1993, 4294901760
        %1995 = vmatpush1.msra.mxu0 %v1994
        %1996 = vmatprep.subr.mxu0 0.0
        %v1997 = vand.u32 %v304, 4294901760
        %v1998 = vsub.f32 %v304, %v1997
        %v1999 = vand.u32 %v1998, 4294901760
        %2000 = vmatpush1.msra.mxu0 %v1999
        %2001 = vmatprep.subr.mxu0 0.0
        %v2002 = vand.u32 %v305, 4294901760
        %v2003 = vsub.f32 %v305, %v2002
        %v2004 = vand.u32 %v2003, 4294901760
        %2005 = vmatpush1.msra.mxu0 %v2004
        %2006 = vmatprep.subr.mxu0 0.0
        %2007 = vmatpush1.msra.mxu0 0.0
        %2008 = vmatprep.subr.mxu0 0.0
        %2009 = vmatpush1.msra.mxu0 0.0
        %2010 = vmatprep.subr.mxu0 0.0
        %2011 = vmatpush1.msra.mxu0 0.0
        %2012 = vmatprep.subr.mxu0 0.0
        %2013 = vmatpush1.msra.mxu0 0.0
        %2014 = vmatprep.subr.mxu0 0.0
        %2015 = vmatpush1.msra.mxu0 0.0
        %2016 = vmatprep.subr.mxu0 0.0
        %2017 = vmatpush1.msra.mxu0 0.0
        %2018 = vmatprep.subr.mxu0 0.0
        %2019 = vmatpush1.msra.mxu0 0.0
        %2020 = vmatprep.subr.mxu0 0.0
        %2021 = vmatpush1.msra.mxu0 0.0
        %2022 = vmatprep.subr.mxu0 0.0
        %2023 = vmatpush1.msra.mxu0 0.0
        %2024 = vmatprep.subr.mxu0 0.0
        %2025 = vmatpush1.msra.mxu0 0.0
        %2026 = vmatprep.subr.mxu0 0.0
        %2027 = vmatpush1.msra.mxu0 0.0
        %2028 = vmatprep.subr.mxu0 0.0
        %2029 = vmatpush1.msra.mxu0 0.0
        %2030 = vmatprep.subr.mxu0 0.0
        %2031 = vmatpush1.msra.mxu0 0.0
        %2032 = vmatprep.subr.mxu0 0.0
        %2033 = vmatpush1.msra.mxu0 0.0
        %2034 = vmatprep.subr.mxu0 0.0
        %2035 = vmatpush1.msra.mxu0 0.0
        %2036 = vmatprep.subr.mxu0 0.0
        %2037 = vmatpush1.msra.mxu0 0.0
        %2038 = vmatprep.subr.mxu0 0.0
        %2039 = vmatpush1.msra.mxu0 0.0
        %2040 = vmatprep.subr.mxu0 0.0
        %2041 = vmatpush1.msra.mxu0 0.0
        %2042 = vmatprep.subr.mxu0 0.0
        %2043 = vmatpush1.msra.mxu0 0.0
        %2044 = vmatprep.subr.mxu0 0.0
        %2045 = vmatpush1.msra.mxu0 0.0
        %2046 = vmatprep.subr.mxu0 0.0
        %2047 = vmatpush1.msra.mxu0 0.0
        %2048 = vmatprep.subr.mxu0 0.0
        %2049 = vmatpush1.msra.mxu0 0.0
        %2050 = vmatprep.subr.mxu0 0.0
        %2051 = vmatpush1.msra.mxu0 0.0
        %2052 = vmatprep.subr.mxu0 0.0
        %2053 = vmatpush1.msra.mxu0 0.0
        %2054 = vmatprep.mubr.f32.mxu0 0.0
        %v2055 = vand.u32 %v1295, 4294901760
        %2056 = vmatmul.mubr.f32.gmra.mrb[0].mxu0 %v2055
        %v2057 = vpop.f32.mrb[0].mxu0
        %v2058 = vadd.f32 %v1891, %v2057
        %v2059 = vpop.f32.mrb[0].mxu0
        %2060 = vmatprep.mubr.f32.mxu0 0.0
        %v2061 = vand.u32 %v1298, 4294901760
        %2062 = vmatmul.mubr.f32.gmra.mrb[0].mxu0 %v2061
        %v2063 = vpop.f32.mrb[0].mxu0
        %v2064 = vadd.f32 %v1899, %v2063
        %v2065 = vpop.f32.mrb[0].mxu0
        %2066 = vmatprep.mubr.f32.mxu0 0.0
        %v2067 = vand.u32 %v1301, 4294901760
        %2068 = vmatmul.mubr.f32.gmra.mrb[0].mxu0 %v2067
        %v2069 = vpop.f32.mrb[0].mxu0
        %v2070 = vadd.f32 %v1907, %v2069
        %v2071 = vpop.f32.mrb[0].mxu0
        %2072 = vmatprep.mubr.f32.mxu0 0.0
        %v2073 = vand.u32 %v1304, 4294901760
        %2074 = vmatmul.mubr.f32.gmra.mrb[0].mxu0 %v2073
        %v2075 = vpop.f32.mrb[0].mxu0
        %v2076 = vadd.f32 %v1915, %v2075
        %v2077 = vpop.f32.mrb[0].mxu0
        %2078 = vmatprep.mubr.f32.mxu0 0.0
        %v2079 = vand.u32 %v1307, 4294901760
        %2080 = vmatmul.mubr.f32.gmra.mrb[0].mxu0 %v2079
        %v2081 = vpop.f32.mrb[0].mxu0
        %v2082 = vadd.f32 %v1923, %v2081
        %v2083 = vpop.f32.mrb[0].mxu0
        %2084 = vmatprep.mubr.f32.mxu0 0.0
        %v2085 = vand.u32 %v1310, 4294901760
        %2086 = vmatmul.mubr.f32.gmra.mrb[0].mxu0 %v2085
        %v2087 = vpop.f32.mrb[0].mxu0
        %v2088 = vadd.f32 %v1931, %v2087
        %v2089 = vpop.f32.mrb[0].mxu0
        %2090 = vmatprep.mubr.f32.mxu0 0.0
        %v2091 = vand.u32 %v1313, 4294901760
        %2092 = vmatmul.mubr.f32.gmra.mrb[0].mxu0 %v2091
        %v2093 = vpop.f32.mrb[0].mxu0
        %v2094 = vadd.f32 %v1939, %v2093
        %v2095 = vpop.f32.mrb[0].mxu0
        %2096 = vmatprep.mubr.f32.mxu0 0.0
        %v2097 = vand.u32 %v1316, 4294901760
        %2098 = vmatmul.mubr.f32.gmra.mrb[0].mxu0 %v2097
        %v2099 = vpop.f32.mrb[0].mxu0
        %v2100 = vadd.f32 %v1947, %v2099
        %v2101 = vpop.f32.mrb[0].mxu0
        %2102 = vmatprep.mubr.f32.mxu0 0.0
        %v2103 = vand.u32 %v1319, 4294901760
        %2104 = vmatmul.mubr.f32.gmra.mrb[0].mxu0 %v2103
        %v2105 = vpop.f32.mrb[0].mxu0
        %v2106 = vadd.f32 %v1955, %v2105
        %v2107 = vpop.f32.mrb[0].mxu0
        %2108 = vmatprep.mubr.f32.mxu0 0.0
        %v2109 = vand.u32 %v1322, 4294901760
        %2110 = vmatmul.mubr.f32.gmra.mrb[0].mxu0 %v2109
        %v2111 = vpop.f32.mrb[0].mxu0
        %v2112 = vadd.f32 %v1963, %v2111
        %v2113 = vpop.f32.mrb[0].mxu0
        %2114 = vdwg.mxu0
        %2115 = vmatprep.subr.mxu0 0.0
        %v2116 = vand.u32 %v298, 4294901760
        %2117 = vmatpush1.msra.mxu0 %v2116
        %2118 = vmatprep.subr.mxu0 0.0
        %v2119 = vand.u32 %v299, 4294901760
        %2120 = vmatpush1.msra.mxu0 %v2119
        %2121 = vmatprep.subr.mxu0 0.0
        %v2122 = vand.u32 %v300, 4294901760
        %2123 = vmatpush1.msra.mxu0 %v2122
        %2124 = vmatprep.subr.mxu0 0.0
        %v2125 = vand.u32 %v301, 4294901760
        %2126 = vmatpush1.msra.mxu0 %v2125
        %2127 = vmatprep.subr.mxu0 0.0
        %v2128 = vand.u32 %v302, 4294901760
        %2129 = vmatpush1.msra.mxu0 %v2128
        %2130 = vmatprep.subr.mxu0 0.0
        %v2131 = vand.u32 %v303, 4294901760
        %2132 = vmatpush1.msra.mxu0 %v2131
        %2133 = vmatprep.subr.mxu0 0.0
        %v2134 = vand.u32 %v304, 4294901760
        %2135 = vmatpush1.msra.mxu0 %v2134
        %2136 = vmatprep.subr.mxu0 0.0
        %v2137 = vand.u32 %v305, 4294901760
        %2138 = vmatpush1.msra.mxu0 %v2137
        %2139 = vmatprep.subr.mxu0 0.0
        %2140 = vmatpush1.msra.mxu0 0.0
        %2141 = vmatprep.subr.mxu0 0.0
        %2142 = vmatpush1.msra.mxu0 0.0
        %2143 = vmatprep.subr.mxu0 0.0
        %2144 = vmatpush1.msra.mxu0 0.0
        %2145 = vmatprep.subr.mxu0 0.0
        %2146 = vmatpush1.msra.mxu0 0.0
        %2147 = vmatprep.subr.mxu0 0.0
        %2148 = vmatpush1.msra.mxu0 0.0
        %2149 = vmatprep.subr.mxu0 0.0
        %2150 = vmatpush1.msra.mxu0 0.0
        %2151 = vmatprep.subr.mxu0 0.0
        %2152 = vmatpush1.msra.mxu0 0.0
        %2153 = vmatprep.subr.mxu0 0.0
        %2154 = vmatpush1.msra.mxu0 0.0
        %2155 = vmatprep.subr.mxu0 0.0
        %2156 = vmatpush1.msra.mxu0 0.0
        %2157 = vmatprep.subr.mxu0 0.0
        %2158 = vmatpush1.msra.mxu0 0.0
        %2159 = vmatprep.subr.mxu0 0.0
        %2160 = vmatpush1.msra.mxu0 0.0
        %2161 = vmatprep.subr.mxu0 0.0
        %2162 = vmatpush1.msra.mxu0 0.0
        %2163 = vmatprep.subr.mxu0 0.0
        %2164 = vmatpush1.msra.mxu0 0.0
        %2165 = vmatprep.subr.mxu0 0.0
        %2166 = vmatpush1.msra.mxu0 0.0
        %2167 = vmatprep.subr.mxu0 0.0
        %2168 = vmatpush1.msra.mxu0 0.0
        %2169 = vmatprep.subr.mxu0 0.0
        %2170 = vmatpush1.msra.mxu0 0.0
        %2171 = vmatprep.subr.mxu0 0.0
        %2172 = vmatpush1.msra.mxu0 0.0
        %2173 = vmatprep.subr.mxu0 0.0
        %2174 = vmatpush1.msra.mxu0 0.0
        %2175 = vmatprep.subr.mxu0 0.0
        %2176 = vmatpush1.msra.mxu0 0.0
        %2177 = vmatprep.subr.mxu0 0.0
        %2178 = vmatpush1.msra.mxu0 0.0
        %2179 = vmatprep.subr.mxu0 0.0
        %2180 = vmatpush1.msra.mxu0 0.0
        %2181 = vmatprep.subr.mxu0 0.0
        %2182 = vmatpush1.msra.mxu0 0.0
        %2183 = vmatprep.subr.mxu0 0.0
        %2184 = vmatpush1.msra.mxu0 0.0
        %2185 = vmatprep.subr.mxu0 0.0
        %2186 = vmatpush1.msra.mxu0 0.0
        %2187 = vmatprep.mubr.f32.mxu0 0.0
        %v2188 = vand.u32 %v1295, 4294901760
        %2189 = vmatmul.mubr.f32.gmra.mrb[0].mxu0 %v2188
        %v2190 = vpop.f32.mrb[0].mxu0
        %v2191 = vadd.f32 %v2058, %v2190
        %v2192 = vpop.f32.mrb[0].mxu0
        %2193 = vmatprep.mubr.f32.mxu0 0.0
        %v2194 = vand.u32 %v1298, 4294901760
        %2195 = vmatmul.mubr.f32.gmra.mrb[0].mxu0 %v2194
        %v2196 = vpop.f32.mrb[0].mxu0
        %v2197 = vadd.f32 %v2064, %v2196
        %v2198 = vpop.f32.mrb[0].mxu0
        %2199 = vmatprep.mubr.f32.mxu0 0.0
        %v2200 = vand.u32 %v1301, 4294901760
        %2201 = vmatmul.mubr.f32.gmra.mrb[0].mxu0 %v2200
        %v2202 = vpop.f32.mrb[0].mxu0
        %v2203 = vadd.f32 %v2070, %v2202
        %v2204 = vpop.f32.mrb[0].mxu0
        %2205 = vmatprep.mubr.f32.mxu0 0.0
        %v2206 = vand.u32 %v1304, 4294901760
        %2207 = vmatmul.mubr.f32.gmra.mrb[0].mxu0 %v2206
        %v2208 = vpop.f32.mrb[0].mxu0
        %v2209 = vadd.f32 %v2076, %v2208
        %v2210 = vpop.f32.mrb[0].mxu0
        %2211 = vmatprep.mubr.f32.mxu0 0.0
        %v2212 = vand.u32 %v1307, 4294901760
        %2213 = vmatmul.mubr.f32.gmra.mrb[0].mxu0 %v2212
        %v2214 = vpop.f32.mrb[0].mxu0
        %v2215 = vadd.f32 %v2082, %v2214
        %v2216 = vpop.f32.mrb[0].mxu0
        %2217 = vmatprep.mubr.f32.mxu0 0.0
        %v2218 = vand.u32 %v1310, 4294901760
        %2219 = vmatmul.mubr.f32.gmra.mrb[0].mxu0 %v2218
        %v2220 = vpop.f32.mrb[0].mxu0
        %v2221 = vadd.f32 %v2088, %v2220
        %v2222 = vpop.f32.mrb[0].mxu0
        %2223 = vmatprep.mubr.f32.mxu0 0.0
        %v2224 = vand.u32 %v1313, 4294901760
        %2225 = vmatmul.mubr.f32.gmra.mrb[0].mxu0 %v2224
        %v2226 = vpop.f32.mrb[0].mxu0
        %v2227 = vadd.f32 %v2094, %v2226
        %v2228 = vpop.f32.mrb[0].mxu0
        %2229 = vmatprep.mubr.f32.mxu0 0.0
        %v2230 = vand.u32 %v1316, 4294901760
        %2231 = vmatmul.mubr.f32.gmra.mrb[0].mxu0 %v2230
        %v2232 = vpop.f32.mrb[0].mxu0
        %v2233 = vadd.f32 %v2100, %v2232
        %v2234 = vpop.f32.mrb[0].mxu0
        %2235 = vmatprep.mubr.f32.mxu0 0.0
        %v2236 = vand.u32 %v1319, 4294901760
        %2237 = vmatmul.mubr.f32.gmra.mrb[0].mxu0 %v2236
        %v2238 = vpop.f32.mrb[0].mxu0
        %v2239 = vadd.f32 %v2106, %v2238
        %v2240 = vpop.f32.mrb[0].mxu0
        %2241 = vmatprep.mubr.f32.mxu0 0.0
        %v2242 = vand.u32 %v1322, 4294901760
        %2243 = vmatmul.mubr.f32.gmra.mrb[0].mxu0 %v2242
        %v2244 = vpop.f32.mrb[0].mxu0
        %v2245 = vadd.f32 %v2112, %v2244
        %v2246 = vpop.f32.mrb[0].mxu0
        %2247 = vdwg.mxu0
        %v2248 = vmul.f32 %v2191, %v2191
        %v2249 = vmul.f32 %v2197, %v2197
        %v2250 = vmul.f32 %v2203, %v2203
        %v2251 = vmul.f32 %v2209, %v2209
        %v2252 = vmul.f32 %v2191, %v2203
        %v2253 = vmul.f32 %v2197, %v2209
        %v2254 = vsub.f32 %v2215, %v2248
        %v2255 = vsub.f32 %v2221, %v2249
        %v2256 = vmax.f32 %v2254, 0.0
        %v2257 = vmax.f32 %v2255, 0.0
        %v2258 = vsub.f32 %v2227, %v2250
        %v2259 = vsub.f32 %v2233, %v2251
        %v2260 = vmax.f32 %v2258, 0.0
        %v2261 = vmax.f32 %v2259, 0.0
        %v2262 = vsub.f32 %v2239, %v2252
        %v2263 = vsub.f32 %v2245, %v2253
        %v2264 = vmul.f32 %v2252, 2.0
        %v2265 = vmul.f32 %v2253, 2.0
        %v2266 = vadd.f32 %v2264, 0.0001
        %v2267 = vadd.f32 %v2265, 0.0001
        %v2268 = vmul.f32 %v2262, 2.0
        %v2269 = vmul.f32 %v2263, 2.0
        %v2270 = vadd.f32 %v2268, 0.0009
        %v2271 = vadd.f32 %v2269, 0.0009
        %v2272 = vmul.f32 %v2266, %v2270
        %v2273 = vmul.f32 %v2267, %v2271
        %v2274 = vadd.f32 %v2248, %v2250
        %v2275 = vadd.f32 %v2249, %v2251
        %v2276 = vadd.f32 %v2274, 0.0001
        %v2277 = vadd.f32 %v2275, 0.0001
        %v2278 = vadd.f32 %v2256, %v2260
        %v2279 = vadd.f32 %v2257, %v2261
        %v2280 = vadd.f32 %v2278, 0.0009
        %v2281 = vadd.f32 %v2279, 0.0009
        %v2282 = vmul.f32 %v2276, %v2280
        %v2283 = vmul.f32 %v2277, %v2281
        %v2284 = vrcp.pop %v2282
        %v2285 = vmul.f32 %v2272, %v2284
        %v2286 = vrcp.pop %v2283
        %v2287 = vmul.f32 %v2273, %v2286
        %v2288 = vsel %vm1293, %v2285, 0.0
        %v2289 = vsel %vm1293, %v2287, 0.0
        %v2290 = vadd.f32 %v2288, %v2289
        %2291 = vadd.xlane.f32.xlu0 %v2290
        %v2292 = vpop.xlane.xlu0 %2291
        %v2293 = vrot.slane %v2292, 4
        %v2294 = vadd.f32 %v2292, %v2293
        %v2295 = vrot.slane %v2294, 2
        %v2296 = vadd.f32 %v2294, %v2295
        %v2297 = vrot.slane %v2296, 1
        %v2298 = vadd.f32 %v2296, %v2297
        %s2299 = vtos %v2298
        %v2300 = vstv %s2299
        %vm2301 = vcmask 0
        %2302 = vst.msk [vmem:[%s283] sm:$0x1] %vm2301, %v2300
        %s2303 = sand.u32 %s127, 1
        %s2304 = scalar_lea.sflag [#allocation4], %s2303
        %s2305 = sand.u32 %s127, 1
        %s2306 = scalar_lea.vmem [#allocation10], %s2305
        // Predicated region
        $region53: #{tpu_custom_call.1} parent=35 // pred_check
          %p2307 = pneg %p137
        $region54: #{tpu_custom_call.1} parent=35 // pred_check_branch
          %2309 = sbr.rel (%p2307) target = $region56
        $region55: #{tpu_custom_call.1} parent=35 // pred_region
          %s2311 = ssub.s32 16, 16
          %2312 = vsyncadd %s2304, %s2311
          %s2313 = smul.addr %s25, 16
          %s2314 = scalar_lea.hbm %s4, %s2313
          %s2316 = sshll.u32 %s2306, 4
          %s2317 = int_to_ptr.vmem [resolvable:$true] %s2316
          %2319 = dma.vmem_to_hbm [thread:$0]  %s2317, 16, %s2314, %s2304
        $region56: #{tpu_custom_call.1} parent=35 // pred_fallthru
          _
      $region36: #{tpu_custom_call.1} parent=5 // pred_fallthru
        _
      %p2320 = scmp.le.s32.totalorder 2, %s20
      // Predicated region
      $region57: #{tpu_custom_call.1} parent=5 // pred_check
        %p2321 = pneg %p2320
      $region58: #{tpu_custom_call.1} parent=5 // pred_check_branch
        %2323 = sbr.rel (%p2321) target = $region60
      $region59: #{tpu_custom_call.1} parent=5 // pred_region
        %s2324 = ssub.s32 %s20, 2
        // Predicated region
        $region61: #{tpu_custom_call.1} parent=59 // pred_check
          %p2325 = pneg %p143
        $region62: #{tpu_custom_call.1} parent=59 // pred_check_branch
          %2327 = sbr.rel (%p2325) target = $region64
        $region63: #{tpu_custom_call.1} parent=59 // pred_region
          %s2328 = sand.u32 %s128, 1
          %s2329 = scalar_lea.sflag [#allocation4], %s2328
          %s2330 = sand.u32 %s128, 1
          %s2331 = scalar_lea.vmem [#allocation10], %s2330
          %2332 = dma.done %s2329, 16
        $region64: #{tpu_custom_call.1} parent=59 // pred_fallthru
          _
      $region60: #{tpu_custom_call.1} parent=5 // pred_fallthru
        _
    $region6: #{tpu_custom_call.1} parent=1 // loop_footer
      %s24 = sadd.s32 1, %s20
    $region7: #{tpu_custom_call.1} parent=1 // loop_footer_branch
      %19 = sbr.rel target = $region3
    $region8: #{tpu_custom_call.1} parent=1 // loop_exit
      _
    %2333 = vsyncpa [#allocation3], 1
    %s2334 = scalar_lea.sflag [#allocation3], 1
    %2335 = vsyncpa %s2334, 1
    %2336 = vsyncpa [#allocation6], 1
    %s2337 = scalar_lea.sflag [#allocation6], 1
    %2338 = vsyncpa %s2337, 1
    %2339 = vsyncpa [#allocation9], 1
    %2340 = vsyncpa [#allocation4], 1
    %s2341 = scalar_lea.sflag [#allocation4], 1
    %2342 = vsyncpa %s2341, 1

</llo_original>
